<compile_context>
chip_gen: v7x
topology: tpu7x:2x2x1
jax: 0.10.0
libtpu: 0.0.40
codegen_flags: <defaults>
</compile_context>

<pallas_src>
import jax
import jax.numpy as jnp
from jax.experimental import pallas as pl
from jax.experimental.pallas import tpu as pltpu

HP = 128  # lane-padded hidden width


# ----------------------------- fused kernel ---------------------------------
def dmpnn_kernel(dst_ref, efk_ref, efi_ref,
                 wm_ref, bm_ref, wih_ref, bih_ref, whh_ref, bhh_ref,
                 out_ref, acc_ref):
    k = pl.program_id(1)

    @pl.when(k == 0)
    def _():
        acc_ref[...] = jnp.zeros_like(acc_ref)

    # --- fused message prepass for this contraction chunk ------------------
    # bf16 operands, f32 accumulation (single-pass MXU on v5e).
    msg = jnp.dot(efk_ref[...].astype(jnp.bfloat16), wm_ref[...],
                  preferred_element_type=jnp.float32) + bm_ref[...]
    msg = jnp.maximum(msg, 0.0).astype(jnp.bfloat16)            # (tile_k, HP)

    # --- one-hot scatter block without a materialized (tile_e, tile_k) iota:
    # (tile_e, 1) global row ids broadcast against the (1, tile_k) dst chunk
    # inside the compare.  0/1 values are exact in bf16.
    tile_e = acc_ref.shape[0]
    row0 = pl.program_id(0) * tile_e
    row_ids = jax.lax.broadcasted_iota(jnp.int32, (tile_e, 1), 0) + row0
    scatter = (row_ids == dst_ref[...]).astype(jnp.bfloat16)    # (tile_e, tile_k)

    # scatter-add for this chunk via one MXU matmul, f32 accumulation.
    acc_ref[...] += jnp.dot(scatter, msg, preferred_element_type=jnp.float32)

    # --- finalize: fused 3-gate GRU on the completed aggregate --------------
    @pl.when(k == pl.num_programs(1) - 1)
    def _():
        ef = efi_ref[...]                                        # (tile_e, HP) f32
        gh = jnp.dot(ef.astype(jnp.bfloat16), whh_ref[...],
                     preferred_element_type=jnp.float32) + bhh_ref[...]
        gi = jnp.dot(acc_ref[...].astype(jnp.bfloat16), wih_ref[...],
                     preferred_element_type=jnp.float32) + bih_ref[...]
        # gates live at 128-lane offsets -> pure lane-aligned VPU slices.
        r = jax.nn.sigmoid(gi[:, :HP] + gh[:, :HP])
        z = jax.nn.sigmoid(gi[:, HP:2 * HP] + gh[:, HP:2 * HP])
        n = jnp.tanh(gi[:, 2 * HP:] + r * gh[:, 2 * HP:])
        # residual uses the full-precision (f32) edge features.
        out_ref[...] = ((1.0 - z) * n + z * ef).astype(out_ref.dtype)


# ------------------------------- wrapper -------------------------------------
def _pick_tiles(E):
    # Contraction chunk: forms the lane dim of the dst / one-hot blocks, so it
    # must be a multiple of 128 (or the full extent E).
    tile_k = E
    for t in (512, 256, 128):
        if E > t and E % t == 0:
            tile_k = t
            break
    # Row tile: keep >= 2 tiles whenever E allows so the "parallel" axis 0 can
    # be split across v7x's two TensorCores (no effect on single-TC v5e/v6e).
    tile_e = E
    for t in (512, 256, 128, 64, 32, 16, 8):
        if E % t == 0 and E // t >= 2:
            tile_e = t
            break
    return tile_e, tile_k


def _pad_linear(w, b, H):
    wp = jnp.zeros((HP, HP), w.dtype).at[:H, :H].set(w)
    bp = jnp.zeros((1, HP), b.dtype).at[:, :H].set(b)
    return wp, bp


def _pad_gru(w, b, H):
    # (H, 3H) gate-concatenated [r|z|n] -> (HP, 3*HP) with each gate starting
    # at a 128-lane offset; padding rows/lanes are zero.
    wp = jnp.zeros((HP, 3 * HP), w.dtype)
    bp = jnp.zeros((1, 3 * HP), b.dtype)
    for g in range(3):
        wp = wp.at[:H, g * HP:g * HP + H].set(w[:, g * H:(g + 1) * H])
        bp = bp.at[:, g * HP:g * HP + H].set(b[:, g * H:(g + 1) * H])
    return wp, bp


def dmpnn_forward(edge_features, edge_index, params):
    E, H = edge_features.shape
    assert H <= HP
    tile_e, tile_k = _pick_tiles(E)
    grid = (E // tile_e, E // tile_k)

    dst = edge_index[1].reshape(1, E).astype(jnp.int32)
    ef_pad = jnp.pad(edge_features, ((0, 0), (0, HP - H)))

    wm, bm = _pad_linear(params["wm"], params["bm"], H)
    wih, bih = _pad_gru(params["wih"], params["bih"], H)
    whh, bhh = _pad_gru(params["whh"], params["bhh"], H)
    # bf16 weights -> single-pass MXU issue; biases stay f32 (added post-acc).
    wm, wih, whh = (w.astype(jnp.bfloat16) for w in (wm, wih, whh))

    resident = lambda shp: pl.BlockSpec(shp, lambda i, k: (0, 0))

    out_pad = pl.pallas_call(
        dmpnn_kernel,
        out_shape=jax.ShapeDtypeStruct((E, HP), edge_features.dtype),
        grid_spec=pltpu.PrefetchScalarGridSpec(
            num_scalar_prefetch=0,
            grid=grid,
            in_specs=[
                pl.BlockSpec((1, tile_k), lambda i, k: (0, k)),    # dst chunk
                pl.BlockSpec((tile_k, HP), lambda i, k: (k, 0)),   # ef (msg chunk)
                pl.BlockSpec((tile_e, HP), lambda i, k: (i, 0)),   # ef (GRU row tile)
                resident((HP, HP)),                                # W_msg  bf16
                resident((1, HP)),                                 # b_msg  f32
                resident((HP, 3 * HP)),                            # W_ih   bf16
                resident((1, 3 * HP)),                             # b_ih   f32
                resident((HP, 3 * HP)),                            # W_hh   bf16
                resident((1, 3 * HP)),                             # b_hh   f32
            ],
            out_specs=pl.BlockSpec((tile_e, HP), lambda i, k: (i, 0)),
            scratch_shapes=[pltpu.VMEM((tile_e, HP), jnp.float32)],
        ),
        compiler_params=pltpu.CompilerParams(
            dimension_semantics=("parallel", "arbitrary"),  # megacore on axis 0
            vmem_limit_bytes=32 << 20,  # conservative budget; fits v7x's 64 MiB
        ),
    )(dst, ef_pad, ef_pad, wm, bm, wih, bih, whh, bhh)

    return out_pad[:, :H]   # drop lane padding


# ------------------------- pure-JAX reference --------------------------------
def dmpnn_reference(edge_features, edge_index, params):
    H = edge_features.shape[1]
    msg = jax.nn.relu(edge_features @ params["wm"] + params["bm"][0])
    agg = jnp.zeros_like(edge_features).at[edge_index[1]].add(msg)
    gi = agg @ params["wih"] + params["bih"][0]
    gh = edge_features @ params["whh"] + params["bhh"][0]
    r = jax.nn.sigmoid(gi[:, :H] + gh[:, :H])
    z = jax.nn.sigmoid(gi[:, H:2 * H] + gh[:, H:2 * H])
    n = jnp.tanh(gi[:, 2 * H:] + r * gh[:, 2 * H:])
    return (1.0 - z) * n + z * edge_features


def init_params(key, hidden_size):
    """Matches torch parameter shapes, stored transposed / gate-concatenated.

    nn.Linear(H, H):  weight (H, H), bias (H)          -> (H_in, H_out), (1, H)
    nn.GRUCell(H, H): weight_ih (3H, H), bias_ih (3H)  -> (H_in, 3H), (1, 3H)
                      weight_hh (3H, H), bias_hh (3H)  -> (H_in, 3H), (1, 3H)
    Gate order along the 3H axis is torch's [r | z | n].
    """
    H = hidden_size
    k = 1.0 / jnp.sqrt(jnp.float32(H))
    keys = jax.random.split(key, 6)
    u = lambda kk, shp: jax.random.uniform(kk, shp, jnp.float32, -k, k)
    return {
        "wm":  u(keys[0], (H, H)),
        "bm":  u(keys[1], (1, H)),
        "wih": u(keys[2], (H, 3 * H)),
        "bih": u(keys[3], (1, 3 * H)),
        "whh": u(keys[4], (H, 3 * H)),
        "bhh": u(keys[5], (1, 3 * H)),
    }


if __name__ == "__main__":
    E, H = 256, 32   # num directed edges, hidden size (small but multi-tile)
    root = jax.random.PRNGKey(0)
    k_feat, k_idx, k_param = jax.random.split(root, 3)

    edge_features = jax.random.normal(k_feat, (E, H), jnp.float32)
    # Destination indices: a permutation (duplicate-free) so the deterministic
    # scatter-add matches PyTorch's `a[idx] += m` exactly.  Source row unused.
    dst = jax.random.permutation(k_idx, jnp.arange(E, dtype=jnp.int32))
    edge_index = jnp.stack([jnp.arange(E, dtype=jnp.int32), dst], axis=0)  # (2, E)

    params = init_params(k_param, H)

    fwd = jax.jit(dmpnn_forward)
    out = jax.block_until_ready(fwd(edge_features, edge_index, params))

    ref = dmpnn_reference(edge_features, edge_index, params)
    assert out.shape == (E, H) and out.dtype == jnp.float32
    # Tolerance: all three matmuls use bf16 operands (per perf review, for
    # single-pass MXU issue on v5e) with f32 accumulation; the 0/1 scatter and
    # the residual path are exact.  Chained ~2^-9 operand rounding gives
    # O(1e-3) per-element deviation, so 1e-2 bounds the max over E*H elements.
    max_diff = float(jnp.max(jnp.abs(out - ref)))
    assert jnp.allclose(out, ref, rtol=1e-2, atol=1e-2), (
        "mismatch vs JAX reference: max |diff| = %g" % max_diff)

    print("KERNEL_OK")
</pallas_src>

<mosaic_0001>
module attributes {stable_mosaic.version = 11 : i64} {
  func.func @dmpnn_kernel(%arg0: i32, %arg1: i32, %arg2: memref<1x128xi32, #tpu.memory_space<vmem>>, %arg3: memref<128x128xf32, #tpu.memory_space<vmem>>, %arg4: memref<128x128xf32, #tpu.memory_space<vmem>>, %arg5: memref<128x128xbf16, #tpu.memory_space<vmem>>, %arg6: memref<1x128xf32, #tpu.memory_space<vmem>>, %arg7: memref<128x384xbf16, #tpu.memory_space<vmem>>, %arg8: memref<1x384xf32, #tpu.memory_space<vmem>>, %arg9: memref<128x384xbf16, #tpu.memory_space<vmem>>, %arg10: memref<1x384xf32, #tpu.memory_space<vmem>>, %arg11: memref<128x128xf32, #tpu.memory_space<vmem>>, %arg12: memref<128x128xf32, #tpu.memory_space<vmem>>) attributes {dimension_semantics = [#tpu.dimension_semantics<parallel>, #tpu.dimension_semantics<arbitrary>], iteration_bounds = array<i64: 2, 2>, scalar_prefetch = 0 : i64, scratch_operands = 1 : i64, tpu.core_type = #tpu.core_type<tc>, window_params = [{transform_indices = @transform_0, window_bounds = array<i64: 1, 128>}, {transform_indices = @transform_1, window_bounds = array<i64: 128, 128>}, {transform_indices = @transform_2, window_bounds = array<i64: 128, 128>}, {pipeline_mode = #tpu.pipeline_mode<synchronous>, transform_indices = @transform_3, window_bounds = array<i64: 128, 128>}, {pipeline_mode = #tpu.pipeline_mode<synchronous>, transform_indices = @transform_4, window_bounds = array<i64: 1, 128>}, {pipeline_mode = #tpu.pipeline_mode<synchronous>, transform_indices = @transform_5, window_bounds = array<i64: 128, 384>}, {pipeline_mode = #tpu.pipeline_mode<synchronous>, transform_indices = @transform_6, window_bounds = array<i64: 1, 384>}, {pipeline_mode = #tpu.pipeline_mode<synchronous>, transform_indices = @transform_7, window_bounds = array<i64: 128, 384>}, {pipeline_mode = #tpu.pipeline_mode<synchronous>, transform_indices = @transform_8, window_bounds = array<i64: 1, 384>}, {transform_indices = @transform_9, window_bounds = array<i64: 128, 128>}]} {
    %c0_i32 = arith.constant 0 : i32
    %0 = arith.cmpi eq, %arg1, %c0_i32 : i32
    %1 = arith.extui %0 : i1 to i32
    %c0_i32_0 = arith.constant 0 : i32
    %2 = arith.cmpi ne, %1, %c0_i32_0 : i32
    scf.if %2 {
      %cst_15 = arith.constant 0.000000e+00 : f32
      %31 = vector.broadcast %cst_15 : f32 to vector<128x128xf32>
      %c0_16 = arith.constant 0 : index
      %c0_17 = arith.constant 0 : index
      %32 = vector.load %arg12[%c0_16, %c0_17] : memref<128x128xf32, #tpu.memory_space<vmem>>, vector<128x128xf32>
      tpu.vector_store %arg12[%c0_16, %c0_17], %31 {strides = array<i32>} : memref<128x128xf32, #tpu.memory_space<vmem>>, vector<128x128xf32>,
    } else {
    }
    %c0 = arith.constant 0 : index
    %c0_1 = arith.constant 0 : index
    %3 = vector.load %arg3[%c0, %c0_1] : memref<128x128xf32, #tpu.memory_space<vmem>>, vector<128x128xf32>
    %4 = arith.truncf %3 : vector<128x128xf32> to vector<128x128xbf16>
    %c0_2 = arith.constant 0 : index
    %c0_3 = arith.constant 0 : index
    %5 = vector.load %arg5[%c0_2, %c0_3] : memref<128x128xbf16, #tpu.memory_space<vmem>>, vector<128x128xbf16>
    %cst = arith.constant dense<0.000000e+00> : vector<128x128xf32>
    %6 = tpu.matmul %4, %5, %cst {dimension_numbers = #tpu.dot_dimension_numbers<[1], [0], [0], [1], [0, 0, 1, 1], [], []>} : vector<128x128xbf16>, vector<128x128xbf16>, vector<128x128xf32> -> vector<128x128xf32>
    %c0_4 = arith.constant 0 : index
    %c0_5 = arith.constant 0 : index
    %7 = vector.load %arg6[%c0_4, %c0_5] : memref<1x128xf32, #tpu.memory_space<vmem>>, vector<1x128xf32>
    %8 = vector.broadcast %7 : vector<1x128xf32> to vector<128x128xf32>
    %9 = arith.addf %6, %8 : vector<128x128xf32>
    %cst_6 = arith.constant 0.000000e+00 : f32
    %10 = vector.broadcast %cst_6 : f32 to vector<128x128xf32>
    %11 = arith.maximumf %9, %10 : vector<128x128xf32>
    %12 = arith.truncf %11 : vector<128x128xf32> to vector<128x128xbf16>
    %c128_i32 = arith.constant 128 : i32
    %13 = arith.muli %arg0, %c128_i32 : i32
    %14 = tpu.iota {dimensions = array<i32: 0>} : vector<128x1xi32>
    %15 = vector.broadcast %13 : i32 to vector<128x1xi32>
    %16 = arith.addi %14, %15 : vector<128x1xi32>
    %c0_7 = arith.constant 0 : index
    %c0_8 = arith.constant 0 : index
    %17 = vector.load %arg2[%c0_7, %c0_8] : memref<1x128xi32, #tpu.memory_space<vmem>>, vector<1x128xi32>
    %18 = vector.broadcast %16 : vector<128x1xi32> to vector<128x128xi32>
    %19 = vector.broadcast %17 : vector<1x128xi32> to vector<128x128xi32>
    %20 = arith.cmpi eq, %18, %19 : vector<128x128xi32>
    %21 = arith.extui %20 : vector<128x128xi1> to vector<128x128xi32>
    %22 = arith.sitofp %21 : vector<128x128xi32> to vector<128x128xf32>
    %23 = arith.truncf %22 : vector<128x128xf32> to vector<128x128xbf16>
    %c0_9 = arith.constant 0 : index
    %c0_10 = arith.constant 0 : index
    %24 = vector.load %arg12[%c0_9, %c0_10] : memref<128x128xf32, #tpu.memory_space<vmem>>, vector<128x128xf32>
    %cst_11 = arith.constant dense<0.000000e+00> : vector<128x128xf32>
    %25 = tpu.matmul %23, %12, %cst_11 {dimension_numbers = #tpu.dot_dimension_numbers<[1], [0], [0], [1], [0, 0, 1, 1], [], []>} : vector<128x128xbf16>, vector<128x128xbf16>, vector<128x128xf32> -> vector<128x128xf32>
    %26 = arith.addf %24, %25 : vector<128x128xf32>
    %c0_12 = arith.constant 0 : index
    %c0_13 = arith.constant 0 : index
    %27 = vector.load %arg12[%c0_12, %c0_13] : memref<128x128xf32, #tpu.memory_space<vmem>>, vector<128x128xf32>
    tpu.vector_store %arg12[%c0_12, %c0_13], %26 {strides = array<i32>} : memref<128x128xf32, #tpu.memory_space<vmem>>, vector<128x128xf32>,
    %c1_i32 = arith.constant 1 : i32
    %28 = arith.cmpi eq, %arg1, %c1_i32 : i32
    %29 = arith.extui %28 : i1 to i32
    %c0_i32_14 = arith.constant 0 : i32
    %30 = arith.cmpi ne, %29, %c0_i32_14 : i32
    scf.if %30 {
      %c0_15 = arith.constant 0 : index
      %c0_16 = arith.constant 0 : index
      %31 = vector.load %arg4[%c0_15, %c0_16] : memref<128x128xf32, #tpu.memory_space<vmem>>, vector<128x128xf32>
      %32 = arith.truncf %31 : vector<128x128xf32> to vector<128x128xbf16>
      %c0_17 = arith.constant 0 : index
      %c0_18 = arith.constant 0 : index
      %33 = vector.load %arg9[%c0_17, %c0_18] : memref<128x384xbf16, #tpu.memory_space<vmem>>, vector<128x384xbf16>
      %cst_19 = arith.constant dense<0.000000e+00> : vector<128x384xf32>
      %34 = tpu.matmul %32, %33, %cst_19 {dimension_numbers = #tpu.dot_dimension_numbers<[1], [0], [0], [1], [0, 0, 1, 1], [], []>} : vector<128x128xbf16>, vector<128x384xbf16>, vector<128x384xf32> -> vector<128x384xf32>
      %c0_20 = arith.constant 0 : index
      %c0_21 = arith.constant 0 : index
      %35 = vector.load %arg10[%c0_20, %c0_21] : memref<1x384xf32, #tpu.memory_space<vmem>>, vector<1x384xf32>
      %36 = vector.broadcast %35 : vector<1x384xf32> to vector<128x384xf32>
      %37 = arith.addf %34, %36 : vector<128x384xf32>
      %c0_22 = arith.constant 0 : index
      %c0_23 = arith.constant 0 : index
      %38 = vector.load %arg12[%c0_22, %c0_23] : memref<128x128xf32, #tpu.memory_space<vmem>>, vector<128x128xf32>
      %39 = arith.truncf %38 : vector<128x128xf32> to vector<128x128xbf16>
      %c0_24 = arith.constant 0 : index
      %c0_25 = arith.constant 0 : index
      %40 = vector.load %arg7[%c0_24, %c0_25] : memref<128x384xbf16, #tpu.memory_space<vmem>>, vector<128x384xbf16>
      %cst_26 = arith.constant dense<0.000000e+00> : vector<128x384xf32>
      %41 = tpu.matmul %39, %40, %cst_26 {dimension_numbers = #tpu.dot_dimension_numbers<[1], [0], [0], [1], [0, 0, 1, 1], [], []>} : vector<128x128xbf16>, vector<128x384xbf16>, vector<128x384xf32> -> vector<128x384xf32>
      %c0_27 = arith.constant 0 : index
      %c0_28 = arith.constant 0 : index
      %42 = vector.load %arg8[%c0_27, %c0_28] : memref<1x384xf32, #tpu.memory_space<vmem>>, vector<1x384xf32>
      %43 = vector.broadcast %42 : vector<1x384xf32> to vector<128x384xf32>
      %44 = arith.addf %41, %43 : vector<128x384xf32>
      %45 = vector.extract_strided_slice %44 {offsets = [0, 0], sizes = [128, 128], strides = [1, 1]} : vector<128x384xf32> to vector<128x128xf32>
      %46 = vector.extract_strided_slice %37 {offsets = [0, 0], sizes = [128, 128], strides = [1, 1]} : vector<128x384xf32> to vector<128x128xf32>
      %47 = arith.addf %45, %46 : vector<128x128xf32>
      %48 = arith.negf %47 : vector<128x128xf32>
      %49 = math.exp %48 : vector<128x128xf32>
      %cst_29 = arith.constant 1.000000e+00 : f32
      %50 = vector.broadcast %cst_29 : f32 to vector<128x128xf32>
      %51 = arith.addf %50, %49 : vector<128x128xf32>
      %52 = arith.divf %50, %51 : vector<128x128xf32>
      %53 = vector.extract_strided_slice %44 {offsets = [0, 128], sizes = [128, 128], strides = [1, 1]} : vector<128x384xf32> to vector<128x128xf32>
      %54 = vector.extract_strided_slice %37 {offsets = [0, 128], sizes = [128, 128], strides = [1, 1]} : vector<128x384xf32> to vector<128x128xf32>
      %55 = arith.addf %53, %54 : vector<128x128xf32>
      %56 = arith.negf %55 : vector<128x128xf32>
      %57 = math.exp %56 : vector<128x128xf32>
      %cst_30 = arith.constant 1.000000e+00 : f32
      %58 = vector.broadcast %cst_30 : f32 to vector<128x128xf32>
      %59 = arith.addf %58, %57 : vector<128x128xf32>
      %60 = arith.divf %58, %59 : vector<128x128xf32>
      %61 = vector.extract_strided_slice %44 {offsets = [0, 256], sizes = [128, 128], strides = [1, 1]} : vector<128x384xf32> to vector<128x128xf32>
      %62 = vector.extract_strided_slice %37 {offsets = [0, 256], sizes = [128, 128], strides = [1, 1]} : vector<128x384xf32> to vector<128x128xf32>
      %63 = arith.mulf %52, %62 : vector<128x128xf32>
      %64 = arith.addf %61, %63 : vector<128x128xf32>
      %65 = math.tanh %64 : vector<128x128xf32>
      %cst_31 = arith.constant 1.000000e+00 : f32
      %66 = vector.broadcast %cst_31 : f32 to vector<128x128xf32>
      %67 = arith.subf %66, %60 : vector<128x128xf32>
      %68 = arith.mulf %67, %65 : vector<128x128xf32>
      %69 = arith.mulf %60, %31 : vector<128x128xf32>
      %70 = arith.addf %68, %69 : vector<128x128xf32>
      %c0_32 = arith.constant 0 : index
      %c0_33 = arith.constant 0 : index
      %71 = vector.load %arg11[%c0_32, %c0_33] : memref<128x128xf32, #tpu.memory_space<vmem>>, vector<128x128xf32>
      tpu.vector_store %arg11[%c0_32, %c0_33], %70 {strides = array<i32>} : memref<128x128xf32, #tpu.memory_space<vmem>>, vector<128x128xf32>,
    } else {
    }
    return
  }
  func.func @transform_0(%arg0: i32, %arg1: i32) -> (i32, i32) {
    %c0_i32 = arith.constant 0 : i32
    %c0_i32_0 = arith.constant 0 : i32
    return %c0_i32, %arg1 : i32, i32
  }
  func.func @transform_1(%arg0: i32, %arg1: i32) -> (i32, i32) {
    %c0_i32 = arith.constant 0 : i32
    %c0_i32_0 = arith.constant 0 : i32
    return %arg1, %c0_i32 : i32, i32
  }
  func.func @transform_2(%arg0: i32, %arg1: i32) -> (i32, i32) {
    %c0_i32 = arith.constant 0 : i32
    %c0_i32_0 = arith.constant 0 : i32
    return %arg0, %c0_i32 : i32, i32
  }
  func.func @transform_3(%arg0: i32, %arg1: i32) -> (i32, i32) {
    %c0_i32 = arith.constant 0 : i32
    %c0_i32_0 = arith.constant 0 : i32
    %c0_i32_1 = arith.constant 0 : i32
    return %c0_i32, %c0_i32_0 : i32, i32
  }
  func.func @transform_4(%arg0: i32, %arg1: i32) -> (i32, i32) {
    %c0_i32 = arith.constant 0 : i32
    %c0_i32_0 = arith.constant 0 : i32
    %c0_i32_1 = arith.constant 0 : i32
    return %c0_i32, %c0_i32_0 : i32, i32
  }
  func.func @transform_5(%arg0: i32, %arg1: i32) -> (i32, i32) {
    %c0_i32 = arith.constant 0 : i32
    %c0_i32_0 = arith.constant 0 : i32
    %c0_i32_1 = arith.constant 0 : i32
    return %c0_i32, %c0_i32_0 : i32, i32
  }
  func.func @transform_6(%arg0: i32, %arg1: i32) -> (i32, i32) {
    %c0_i32 = arith.constant 0 : i32
    %c0_i32_0 = arith.constant 0 : i32
    %c0_i32_1 = arith.constant 0 : i32
    return %c0_i32, %c0_i32_0 : i32, i32
  }
  func.func @transform_7(%arg0: i32, %arg1: i32) -> (i32, i32) {
    %c0_i32 = arith.constant 0 : i32
    %c0_i32_0 = arith.constant 0 : i32
    %c0_i32_1 = arith.constant 0 : i32
    return %c0_i32, %c0_i32_0 : i32, i32
  }
  func.func @transform_8(%arg0: i32, %arg1: i32) -> (i32, i32) {
    %c0_i32 = arith.constant 0 : i32
    %c0_i32_0 = arith.constant 0 : i32
    %c0_i32_1 = arith.constant 0 : i32
    return %c0_i32, %c0_i32_0 : i32, i32
  }
  func.func @transform_9(%arg0: i32, %arg1: i32) -> (i32, i32) {
    %c0_i32 = arith.constant 0 : i32
    %c0_i32_0 = arith.constant 0 : i32
    return %arg0, %c0_i32 : i32, i32
  }
}

</mosaic_0001>

<llo_original>
// kernel: dmpnn_forward.1
$region0: #{dmpnn_forward.1}
  #allocation0 [shape = 'u32[]', space=smem, size = 0x4, offset = 0x4, fixed_abs, tag = 'smem constant byte address 0x4 - core index']
  #allocation1 [shape = 'u32[144,128]{1,0:T(1,128)}', space=vmem, size = 0x12000, scoped, tag = 'internal scratch']
  #allocation2 [shape = 'f32[128,128]{1,0:T(8,128)}', space=vmem, size = 0x10000, scoped, tag = 'scratch operand']
  %s0 = inlined_call_operand.vmem [shape: s32[1,256], index: 0, kind: input, shape index: {}]
  %s1 = inlined_call_operand.vmem [shape: f32[256,128], index: 1, kind: input, shape index: {}, may-alias: {1,2}]
  %s2 = inlined_call_operand.vmem [shape: f32[256,128], index: 2, kind: input, shape index: {}, may-alias: {1,2}]
  %s3 = inlined_call_operand.vmem [shape: bf16[128,128], index: 3, kind: input, shape index: {}]
  %s4 = inlined_call_operand.vmem [shape: f32[1,128], index: 4, kind: input, shape index: {}]
  %s5 = inlined_call_operand.vmem [shape: bf16[128,384], index: 5, kind: input, shape index: {}]
  %s6 = inlined_call_operand.vmem [shape: f32[1,384], index: 6, kind: input, shape index: {}]
  %s7 = inlined_call_operand.vmem [shape: bf16[128,384], index: 7, kind: input, shape index: {}]
  %s8 = inlined_call_operand.vmem [shape: f32[1,384], index: 8, kind: input, shape index: {}]
  %s9 = inlined_call_operand.vmem [shape: f32[256,128], index: 9, kind: output, shape index: {}]
  %s10 = sld [smem:[#allocation0]]
  $region77: #{dmpnn_forward.1} parent=0
    _
  %s12 = ssub.s32 1, %s10
  %s13 = scalar_select 0, %s12, %s10
  loop: start=0, step=1, limit=6
  $region2: #{dmpnn_forward.1} parent=0 // loop_pre_header
    _
  $region3: #{dmpnn_forward.1} parent=0 // loop_header
    %s15 = sphi 0, %s19
    %p16 = scmp.ge.s32.totalorder %s15, 6
    %s22 = sphi 0, %s34
    %s23 = sphi 0, %s30
    %s24 = sphi 0, %s22
    %s25 = sphi 0, %s23
    %s26 = sphi 0, %s24
    %s27 = sphi 0, %s25
    %s37 = sphi 0, %s39
    %s40 = sphi 0, %s37
    %s41 = sphi 0, %s40
    %s57 = sphi 0, %s41
    %s63 = sphi 0, %s65
    %s66 = sphi 0, %s63
    %s67 = sphi 0, %s66
    %s83 = sphi 0, %s67
    %s89 = sphi 0, %s91
    %s92 = sphi 0, %s89
    %s93 = sphi 0, %s92
    %s109 = sphi 0, %s93
    %s113 = sphi 0, %s113
    %s115 = sphi 0, %s113
    %s116 = sphi 0, %s115
    %s130 = sphi 0, %s116
    %s134 = sphi 0, %s134
    %s136 = sphi 0, %s134
    %s137 = sphi 0, %s136
    %s151 = sphi 0, %s137
    %s155 = sphi 0, %s155
    %s157 = sphi 0, %s155
    %s158 = sphi 0, %s157
    %s172 = sphi 0, %s158
    %s176 = sphi 0, %s176
    %s178 = sphi 0, %s176
    %s179 = sphi 0, %s178
    %s193 = sphi 0, %s179
    %s197 = sphi 0, %s197
    %s199 = sphi 0, %s197
    %s200 = sphi 0, %s199
    %s214 = sphi 0, %s200
    %s218 = sphi 0, %s218
    %s220 = sphi 0, %s218
    %s221 = sphi 0, %s220
    %s235 = sphi 0, %s221
    %s241 = sphi 0, %s243
    %s244 = sphi 0, %s241
    %s245 = sphi 0, %s244
    %s261 = sphi 0, %s245
  $region4: #{dmpnn_forward.1} parent=0 // loop_header_branch
    %18 = sbr.rel (%p16) target = $region8
  $region5: #{dmpnn_forward.1} parent=0 // loop_body
    %s20 = ssub.s32 %s15, 1
    %s21 = ssub.s32 %s15, 2
    %s28 = sadd.s32 1, %s23
    %p29 = scmp.ge.s32.totalorder %s28, 2
    %s30 = scalar_select %p29, 0, %s28
    %s31 = sadd.s32 1, %s22
    %s32 = scalar_select %p29, %s31, %s22
    %p33 = scmp.ge.s32.totalorder %s32, 2
    %s34 = scalar_select %p33, 0, %s32
    %s35 = ssub.s32 %s23, %s30
    %p36 = scmp.eq.s32.totalorder %s35, 0
    %s38 = sadd.s32 %s37, 1
    %s39 = scalar_select %p36, %s37, %s38
    %p42 = pneg %p36
    %p43 = scmp.eq.s32.totalorder %s15, 3
    %p44 = por %p42, %p43
    %p45 = scmp.ne.s32.totalorder %s37, %s40
    %p46 = scmp.eq.s32.totalorder %s15, 0
    %p47 = por %p45, %p46
    %p48 = scmp.ne.s32.totalorder %s37, %s40
    %p49 = scmp.eq.s32.totalorder %s20, 3
    %p50 = por %p48, %p49
    %p51 = scmp.ne.s32.totalorder %s40, %s41
    %p52 = scmp.eq.s32.totalorder %s20, 0
    %p53 = por %p51, %p52
    %p54 = scmp.ne.s32.totalorder %s40, %s41
    %p55 = scmp.eq.s32.totalorder %s21, 3
    %p56 = por %p54, %p55
    %p58 = scmp.ne.s32.totalorder %s41, %s57
    %p59 = scmp.eq.s32.totalorder %s21, 0
    %p60 = por %p58, %p59
    %s61 = ssub.s32 %s23, %s30
    %p62 = scmp.eq.s32.totalorder %s61, 0
    %s64 = sadd.s32 %s63, 1
    %s65 = scalar_select %p62, %s63, %s64
    %p68 = pneg %p62
    %p69 = scmp.eq.s32.totalorder %s15, 3
    %p70 = por %p68, %p69
    %p71 = scmp.ne.s32.totalorder %s63, %s66
    %p72 = scmp.eq.s32.totalorder %s15, 0
    %p73 = por %p71, %p72
    %p74 = scmp.ne.s32.totalorder %s63, %s66
    %p75 = scmp.eq.s32.totalorder %s20, 3
    %p76 = por %p74, %p75
    %p77 = scmp.ne.s32.totalorder %s66, %s67
    %p78 = scmp.eq.s32.totalorder %s20, 0
    %p79 = por %p77, %p78
    %p80 = scmp.ne.s32.totalorder %s66, %s67
    %p81 = scmp.eq.s32.totalorder %s21, 3
    %p82 = por %p80, %p81
    %p84 = scmp.ne.s32.totalorder %s67, %s83
    %p85 = scmp.eq.s32.totalorder %s21, 0
    %p86 = por %p84, %p85
    %s87 = ssub.s32 %s22, %s34
    %p88 = scmp.eq.s32.totalorder %s87, 0
    %s90 = sadd.s32 %s89, 1
    %s91 = scalar_select %p88, %s89, %s90
    %p94 = pneg %p88
    %p95 = scmp.eq.s32.totalorder %s15, 3
    %p96 = por %p94, %p95
    %p97 = scmp.ne.s32.totalorder %s89, %s92
    %p98 = scmp.eq.s32.totalorder %s15, 0
    %p99 = por %p97, %p98
    %p100 = scmp.ne.s32.totalorder %s89, %s92
    %p101 = scmp.eq.s32.totalorder %s20, 3
    %p102 = por %p100, %p101
    %p103 = scmp.ne.s32.totalorder %s92, %s93
    %p104 = scmp.eq.s32.totalorder %s20, 0
    %p105 = por %p103, %p104
    %p106 = scmp.ne.s32.totalorder %s92, %s93
    %p107 = scmp.eq.s32.totalorder %s21, 3
    %p108 = por %p106, %p107
    %p110 = scmp.ne.s32.totalorder %s93, %s109
    %p111 = scmp.eq.s32.totalorder %s21, 0
    %p112 = por %p110, %p111
    %s114 = sadd.s32 %s113, 1
    %p117 = scmp.eq.s32.totalorder %s15, 3
    %p118 = scmp.ne.s32.totalorder %s113, %s115
    %p119 = scmp.eq.s32.totalorder %s15, 0
    %p120 = por %p118, %p119
    %p121 = scmp.ne.s32.totalorder %s113, %s115
    %p122 = scmp.eq.s32.totalorder %s20, 3
    %p123 = por %p121, %p122
    %p124 = scmp.ne.s32.totalorder %s115, %s116
    %p125 = scmp.eq.s32.totalorder %s20, 0
    %p126 = por %p124, %p125
    %p127 = scmp.ne.s32.totalorder %s115, %s116
    %p128 = scmp.eq.s32.totalorder %s21, 3
    %p129 = por %p127, %p128
    %p131 = scmp.ne.s32.totalorder %s116, %s130
    %p132 = scmp.eq.s32.totalorder %s21, 0
    %p133 = por %p131, %p132
    %s135 = sadd.s32 %s134, 1
    %p138 = scmp.eq.s32.totalorder %s15, 3
    %p139 = scmp.ne.s32.totalorder %s134, %s136
    %p140 = scmp.eq.s32.totalorder %s15, 0
    %p141 = por %p139, %p140
    %p142 = scmp.ne.s32.totalorder %s134, %s136
    %p143 = scmp.eq.s32.totalorder %s20, 3
    %p144 = por %p142, %p143
    %p145 = scmp.ne.s32.totalorder %s136, %s137
    %p146 = scmp.eq.s32.totalorder %s20, 0
    %p147 = por %p145, %p146
    %p148 = scmp.ne.s32.totalorder %s136, %s137
    %p149 = scmp.eq.s32.totalorder %s21, 3
    %p150 = por %p148, %p149
    %p152 = scmp.ne.s32.totalorder %s137, %s151
    %p153 = scmp.eq.s32.totalorder %s21, 0
    %p154 = por %p152, %p153
    %s156 = sadd.s32 %s155, 1
    %p159 = scmp.eq.s32.totalorder %s15, 3
    %p160 = scmp.ne.s32.totalorder %s155, %s157
    %p161 = scmp.eq.s32.totalorder %s15, 0
    %p162 = por %p160, %p161
    %p163 = scmp.ne.s32.totalorder %s155, %s157
    %p164 = scmp.eq.s32.totalorder %s20, 3
    %p165 = por %p163, %p164
    %p166 = scmp.ne.s32.totalorder %s157, %s158
    %p167 = scmp.eq.s32.totalorder %s20, 0
    %p168 = por %p166, %p167
    %p169 = scmp.ne.s32.totalorder %s157, %s158
    %p170 = scmp.eq.s32.totalorder %s21, 3
    %p171 = por %p169, %p170
    %p173 = scmp.ne.s32.totalorder %s158, %s172
    %p174 = scmp.eq.s32.totalorder %s21, 0
    %p175 = por %p173, %p174
    %s177 = sadd.s32 %s176, 1
    %p180 = scmp.eq.s32.totalorder %s15, 3
    %p181 = scmp.ne.s32.totalorder %s176, %s178
    %p182 = scmp.eq.s32.totalorder %s15, 0
    %p183 = por %p181, %p182
    %p184 = scmp.ne.s32.totalorder %s176, %s178
    %p185 = scmp.eq.s32.totalorder %s20, 3
    %p186 = por %p184, %p185
    %p187 = scmp.ne.s32.totalorder %s178, %s179
    %p188 = scmp.eq.s32.totalorder %s20, 0
    %p189 = por %p187, %p188
    %p190 = scmp.ne.s32.totalorder %s178, %s179
    %p191 = scmp.eq.s32.totalorder %s21, 3
    %p192 = por %p190, %p191
    %p194 = scmp.ne.s32.totalorder %s179, %s193
    %p195 = scmp.eq.s32.totalorder %s21, 0
    %p196 = por %p194, %p195
    %s198 = sadd.s32 %s197, 1
    %p201 = scmp.eq.s32.totalorder %s15, 3
    %p202 = scmp.ne.s32.totalorder %s197, %s199
    %p203 = scmp.eq.s32.totalorder %s15, 0
    %p204 = por %p202, %p203
    %p205 = scmp.ne.s32.totalorder %s197, %s199
    %p206 = scmp.eq.s32.totalorder %s20, 3
    %p207 = por %p205, %p206
    %p208 = scmp.ne.s32.totalorder %s199, %s200
    %p209 = scmp.eq.s32.totalorder %s20, 0
    %p210 = por %p208, %p209
    %p211 = scmp.ne.s32.totalorder %s199, %s200
    %p212 = scmp.eq.s32.totalorder %s21, 3
    %p213 = por %p211, %p212
    %p215 = scmp.ne.s32.totalorder %s200, %s214
    %p216 = scmp.eq.s32.totalorder %s21, 0
    %p217 = por %p215, %p216
    %s219 = sadd.s32 %s218, 1
    %p222 = scmp.eq.s32.totalorder %s15, 3
    %p223 = scmp.ne.s32.totalorder %s218, %s220
    %p224 = scmp.eq.s32.totalorder %s15, 0
    %p225 = por %p223, %p224
    %p226 = scmp.ne.s32.totalorder %s218, %s220
    %p227 = scmp.eq.s32.totalorder %s20, 3
    %p228 = por %p226, %p227
    %p229 = scmp.ne.s32.totalorder %s220, %s221
    %p230 = scmp.eq.s32.totalorder %s20, 0
    %p231 = por %p229, %p230
    %p232 = scmp.ne.s32.totalorder %s220, %s221
    %p233 = scmp.eq.s32.totalorder %s21, 3
    %p234 = por %p232, %p233
    %p236 = scmp.ne.s32.totalorder %s221, %s235
    %p237 = scmp.eq.s32.totalorder %s21, 0
    %p238 = por %p236, %p237
    %s239 = ssub.s32 %s22, %s34
    %p240 = scmp.eq.s32.totalorder %s239, 0
    %s242 = sadd.s32 %s241, 1
    %s243 = scalar_select %p240, %s241, %s242
    %p246 = pneg %p240
    %p247 = scmp.eq.s32.totalorder %s15, 3
    %p248 = por %p246, %p247
    %p249 = scmp.ne.s32.totalorder %s241, %s244
    %p250 = scmp.eq.s32.totalorder %s15, 0
    %p251 = por %p249, %p250
    %p252 = scmp.ne.s32.totalorder %s241, %s244
    %p253 = scmp.eq.s32.totalorder %s20, 3
    %p254 = por %p252, %p253
    %p255 = scmp.ne.s32.totalorder %s244, %s245
    %p256 = scmp.eq.s32.totalorder %s20, 0
    %p257 = por %p255, %p256
    %p258 = scmp.ne.s32.totalorder %s244, %s245
    %p259 = scmp.eq.s32.totalorder %s21, 3
    %p260 = por %p258, %p259
    %p262 = scmp.ne.s32.totalorder %s245, %s261
    %p263 = scmp.eq.s32.totalorder %s21, 0
    %p264 = por %p262, %p263
    %p265 = scmp.le.s32.totalorder 1, %s15
    %p266 = scmp.lt.s32.totalorder %s15, 5
    %p267 = pnand %p265, %p266
    %p268 = pneg %p267
    // Predicated region
    $region9: #{dmpnn_forward.1} parent=5 // pred_check
      _
    $region10: #{dmpnn_forward.1} parent=5 // pred_check_branch
      %270 = sbr.rel (%p267) target = $region12
    $region11: #{dmpnn_forward.1} parent=5 // pred_region
      %s271 = ssub.s32 %s15, 1
      // Predicated region
      $region13: #{dmpnn_forward.1} parent=11 // pred_check
        %p272 = pneg %p126
      $region14: #{dmpnn_forward.1} parent=11 // pred_check_branch
        %274 = sbr.rel (%p272) target = $region16
      $region15: #{dmpnn_forward.1} parent=11 // pred_region
        _
      $region16: #{dmpnn_forward.1} parent=11 // pred_fallthru
        _
      // Predicated region
      $region17: #{dmpnn_forward.1} parent=11 // pred_check
        %p275 = pneg %p147
      $region18: #{dmpnn_forward.1} parent=11 // pred_check_branch
        %277 = sbr.rel (%p275) target = $region20
      $region19: #{dmpnn_forward.1} parent=11 // pred_region
        _
      $region20: #{dmpnn_forward.1} parent=11 // pred_fallthru
        _
      // Predicated region
      $region21: #{dmpnn_forward.1} parent=11 // pred_check
        %p278 = pneg %p168
      $region22: #{dmpnn_forward.1} parent=11 // pred_check_branch
        %280 = sbr.rel (%p278) target = $region24
      $region23: #{dmpnn_forward.1} parent=11 // pred_region
        _
      $region24: #{dmpnn_forward.1} parent=11 // pred_fallthru
        _
      // Predicated region
      $region25: #{dmpnn_forward.1} parent=11 // pred_check
        %p281 = pneg %p189
      $region26: #{dmpnn_forward.1} parent=11 // pred_check_branch
        %283 = sbr.rel (%p281) target = $region28
      $region27: #{dmpnn_forward.1} parent=11 // pred_region
        _
      $region28: #{dmpnn_forward.1} parent=11 // pred_fallthru
        _
      // Predicated region
      $region29: #{dmpnn_forward.1} parent=11 // pred_check
        %p284 = pneg %p210
      $region30: #{dmpnn_forward.1} parent=11 // pred_check_branch
        %286 = sbr.rel (%p284) target = $region32
      $region31: #{dmpnn_forward.1} parent=11 // pred_region
        _
      $region32: #{dmpnn_forward.1} parent=11 // pred_fallthru
        _
      // Predicated region
      $region33: #{dmpnn_forward.1} parent=11 // pred_check
        %p287 = pneg %p231
      $region34: #{dmpnn_forward.1} parent=11 // pred_check_branch
        %289 = sbr.rel (%p287) target = $region36
      $region35: #{dmpnn_forward.1} parent=11 // pred_region
        _
      $region36: #{dmpnn_forward.1} parent=11 // pred_fallthru
        _
    $region12: #{dmpnn_forward.1} parent=5 // pred_fallthru
      _
    %p290 = scmp.lt.s32.totalorder %s15, 4
    // Predicated region
    $region37: #{dmpnn_forward.1} parent=5 // pred_check
      %p291 = pneg %p290
    $region38: #{dmpnn_forward.1} parent=5 // pred_check_branch
      %293 = sbr.rel (%p291) target = $region40
    $region39: #{dmpnn_forward.1} parent=5 // pred_region
      // Predicated region
      $region41: #{dmpnn_forward.1} parent=39 // pred_check
        %p294 = pneg %p47
      $region42: #{dmpnn_forward.1} parent=39 // pred_check_branch
        %296 = sbr.rel (%p294) target = $region44
      $region43: #{dmpnn_forward.1} parent=39 // pred_region
        %p297 = scmp.lt.s32.totalorder %s23, 1
        %s298 = scalar_select %p297, %s23, 1
        %s299 = scalar_lea.vmem %s0, %s298
      $region44: #{dmpnn_forward.1} parent=39 // pred_fallthru
        _
      // Predicated region
      $region45: #{dmpnn_forward.1} parent=39 // pred_check
        %p300 = pneg %p73
      $region46: #{dmpnn_forward.1} parent=39 // pred_check_branch
        %302 = sbr.rel (%p300) target = $region48
      $region47: #{dmpnn_forward.1} parent=39 // pred_region
        %s303 = smul.u32 16, %s23
        %p304 = scmp.lt.s32.totalorder %s303, 31
        %s305 = scalar_select %p304, %s303, 31
        %s306 = smul.addr %s305, 8
        %s307 = scalar_lea.vmem %s1, %s306
        %s308 = smul.u32 16, %s23
      $region48: #{dmpnn_forward.1} parent=39 // pred_fallthru
        _
      // Predicated region
      $region49: #{dmpnn_forward.1} parent=39 // pred_check
        %p309 = pneg %p99
      $region50: #{dmpnn_forward.1} parent=39 // pred_check_branch
        %311 = sbr.rel (%p309) target = $region52
      $region51: #{dmpnn_forward.1} parent=39 // pred_region
        %s312 = smul.u32 16, %s22
        %p313 = scmp.lt.s32.totalorder %s312, 31
        %s314 = scalar_select %p313, %s312, 31
        %s315 = smul.addr %s314, 8
        %s316 = scalar_lea.vmem %s2, %s315
        %s317 = smul.u32 16, %s22
      $region52: #{dmpnn_forward.1} parent=39 // pred_fallthru
        _
    $region40: #{dmpnn_forward.1} parent=5 // pred_fallthru
      _
    %p318 = scmp.le.s32.totalorder 1, %s15
    %p319 = scmp.lt.s32.totalorder %s15, 5
    %p320 = pnand %p318, %p319
    %p321 = pneg %p320
    // Predicated region
    $region53: #{dmpnn_forward.1} parent=5 // pred_check
      _
    $region54: #{dmpnn_forward.1} parent=5 // pred_check_branch
      %323 = sbr.rel (%p320) target = $region56
    $region55: #{dmpnn_forward.1} parent=5 // pred_region
      %s324 = ssub.s32 %s15, 1
      %p325 = scmp.lt.s32.totalorder %s25, 1
      %s326 = scalar_select %p325, %s25, 1
      %s327 = scalar_lea.vmem %s0, %s326
      %p328 = pneg %p53
      %p329 = pneg %p50
      %s330 = smul.u32 16, %s25
      %p331 = scmp.lt.s32.totalorder %s330, 31
      %s332 = scalar_select %p331, %s330, 31
      %s333 = smul.addr %s332, 8
      %s334 = scalar_lea.vmem %s1, %s333
      %p335 = pneg %p79
      %p336 = pneg %p76
      %s337 = smul.u32 16, %s24
      %p338 = scmp.lt.s32.totalorder %s337, 31
      %s339 = scalar_select %p338, %s337, 31
      %s340 = smul.addr %s339, 8
      %s341 = scalar_lea.vmem %s2, %s340
      %p342 = pneg %p105
      %p343 = pneg %p102
      %p344 = pneg %p126
      %p345 = pneg %p123
      %p346 = pneg %p147
      %p347 = pneg %p144
      %p348 = pneg %p168
      %p349 = pneg %p165
      %p350 = pneg %p189
      %p351 = pneg %p186
      %p352 = pneg %p210
      %p353 = pneg %p207
      %p354 = pneg %p231
      %p355 = pneg %p228
      %p356 = pneg %p257
      %p357 = pneg %p254
      %s358 = smul.u32 16, %s24
      %p359 = scmp.lt.s32.totalorder %s358, 31
      %s360 = scalar_select %p359, %s358, 31
      %s361 = smul.addr %s360, 8
      %s362 = scalar_lea.vmem %s9, %s361
      %p363 = scmp.lt.s32.totalorder %s25, 1
      %s364 = scalar_select %p363, %s25, 1
      %s365 = scalar_lea.vmem %s0, %s364
      %s366 = smul.u32 16, %s25
      %p367 = scmp.lt.s32.totalorder %s366, 31
      %s368 = scalar_select %p367, %s366, 31
      %s369 = smul.addr %s368, 8
      %s370 = scalar_lea.vmem %s1, %s369
      %s371 = smul.u32 16, %s25
      %s372 = smul.u32 16, %s24
      %p373 = scmp.lt.s32.totalorder %s372, 31
      %s374 = scalar_select %p373, %s372, 31
      %s375 = smul.addr %s374, 8
      %s376 = scalar_lea.vmem %s2, %s375
      %s377 = smul.u32 16, %s24
      %s378 = smul.u32 16, %s24
      %p379 = scmp.lt.s32.totalorder %s378, 31
      %s380 = scalar_select %p379, %s378, 31
      %s381 = smul.addr %s380, 8
      %s382 = scalar_lea.vmem %s9, %s381
      %s383 = smul.u32 16, %s24
      %p385 = scmp.eq.s32.totalorder %s25, 0
      // Predicated region
      $region57: #{dmpnn_forward.1} parent=55 // pred_check
        %p386 = pneg %p385
      $region58: #{dmpnn_forward.1} parent=55 // pred_check_branch
        %388 = sbr.rel (%p386) target = $region60
      $region59: #{dmpnn_forward.1} parent=55 // pred_region
        %389 = vst [vmem:[#allocation2] sm:$0xff] 0.0
        %390 = vst [vmem:[#allocation2 + $0x8] sm:$0xff] 0.0
        %391 = vst [vmem:[#allocation2 + $0x10] sm:$0xff] 0.0
        %392 = vst [vmem:[#allocation2 + $0x18] sm:$0xff] 0.0
        %393 = vst [vmem:[#allocation2 + $0x20] sm:$0xff] 0.0
        %394 = vst [vmem:[#allocation2 + $0x28] sm:$0xff] 0.0
        %395 = vst [vmem:[#allocation2 + $0x30] sm:$0xff] 0.0
        %396 = vst [vmem:[#allocation2 + $0x38] sm:$0xff] 0.0
        %397 = vst [vmem:[#allocation2 + $0x40] sm:$0xff] 0.0
        %398 = vst [vmem:[#allocation2 + $0x48] sm:$0xff] 0.0
        %399 = vst [vmem:[#allocation2 + $0x50] sm:$0xff] 0.0
        %400 = vst [vmem:[#allocation2 + $0x58] sm:$0xff] 0.0
        %401 = vst [vmem:[#allocation2 + $0x60] sm:$0xff] 0.0
        %402 = vst [vmem:[#allocation2 + $0x68] sm:$0xff] 0.0
        %403 = vst [vmem:[#allocation2 + $0x70] sm:$0xff] 0.0
        %404 = vst [vmem:[#allocation2 + $0x78] sm:$0xff] 0.0
      $region60: #{dmpnn_forward.1} parent=55 // pred_fallthru
        _
      %v405 = vld [vmem:[%s370] sm:$0xff]
      %v406 = vld [vmem:[%s370 + $0x8] sm:$0xff]
      %v407 = vld [vmem:[%s370 + $0x10] sm:$0xff]
      %v408 = vld [vmem:[%s370 + $0x18] sm:$0xff]
      %v409 = vld [vmem:[%s370 + $0x20] sm:$0xff]
      %v410 = vld [vmem:[%s370 + $0x28] sm:$0xff]
      %v411 = vld [vmem:[%s370 + $0x30] sm:$0xff]
      %v412 = vld [vmem:[%s370 + $0x38] sm:$0xff]
      %v413 = vld [vmem:[%s370 + $0x40] sm:$0xff]
      %v414 = vld [vmem:[%s370 + $0x48] sm:$0xff]
      %v415 = vld [vmem:[%s370 + $0x50] sm:$0xff]
      %v416 = vld [vmem:[%s370 + $0x58] sm:$0xff]
      %v417 = vld [vmem:[%s370 + $0x60] sm:$0xff]
      %v418 = vld [vmem:[%s370 + $0x68] sm:$0xff]
      %v419 = vld [vmem:[%s370 + $0x70] sm:$0xff]
      %v420 = vld [vmem:[%s370 + $0x78] sm:$0xff]
      %v421 = vpack.c.bf16 %v406, %v405
      %v422 = vpack.c.bf16 %v408, %v407
      %v423 = vpack.c.bf16 %v410, %v409
      %v424 = vpack.c.bf16 %v412, %v411
      %v425 = vpack.c.bf16 %v414, %v413
      %v426 = vpack.c.bf16 %v416, %v415
      %v427 = vpack.c.bf16 %v418, %v417
      %v428 = vpack.c.bf16 %v420, %v419
      %v429 = vld [vmem:[%s3] sm:$0xf]
      %v430 = vld [vmem:[%s3 + $0x4] sm:$0xf]
      %v431 = vld [vmem:[%s3 + $0x8] sm:$0xf]
      %v432 = vld [vmem:[%s3 + $0xc] sm:$0xf]
      %v433 = vld [vmem:[%s3 + $0x10] sm:$0xf]
      %v434 = vld [vmem:[%s3 + $0x14] sm:$0xf]
      %v435 = vld [vmem:[%s3 + $0x18] sm:$0xf]
      %v436 = vld [vmem:[%s3 + $0x1c] sm:$0xf]
      %v437 = vld [vmem:[%s3 + $0x20] sm:$0xf]
      %v438 = vld [vmem:[%s3 + $0x24] sm:$0xf]
      %v439 = vld [vmem:[%s3 + $0x28] sm:$0xf]
      %v440 = vld [vmem:[%s3 + $0x2c] sm:$0xf]
      %v441 = vld [vmem:[%s3 + $0x30] sm:$0xf]
      %v442 = vld [vmem:[%s3 + $0x34] sm:$0xf]
      %v443 = vld [vmem:[%s3 + $0x38] sm:$0xf]
      %v444 = vld [vmem:[%s3 + $0x3c] sm:$0xf]
      %v445 = vld [vmem:[%s4] sm:$0x1]
      %v447 = vlaneseq
      %v448 = vshrl.u32 %v447, 7
      %v449 = vsub.s32 0, %v448
      %v450 = vrot.slane %v445, %v449
      %v468 = vunpack.c.l.b16 %v429
      %v469 = vunpack.c.l.b16 %v430
      %v470 = vunpack.c.l.b16 %v431
      %v471 = vunpack.c.l.b16 %v432
      %v472 = vunpack.c.l.b16 %v433
      %v473 = vunpack.c.l.b16 %v434
      %v474 = vunpack.c.l.b16 %v435
      %v475 = vunpack.c.l.b16 %v436
      %v476 = vunpack.c.l.b16 %v437
      %v477 = vunpack.c.l.b16 %v438
      %v478 = vunpack.c.l.b16 %v439
      %v479 = vunpack.c.l.b16 %v440
      %v480 = vunpack.c.l.b16 %v441
      %v481 = vunpack.c.l.b16 %v442
      %v482 = vunpack.c.l.b16 %v443
      %v483 = vunpack.c.l.b16 %v444
      %v484 = vpack.c.b16 %v469, %v468
      %v485 = vpack.c.b16 %v471, %v470
      %v486 = vpack.c.b16 %v473, %v472
      %v487 = vpack.c.b16 %v475, %v474
      %v488 = vpack.c.b16 %v477, %v476
      %v489 = vpack.c.b16 %v479, %v478
      %v490 = vpack.c.b16 %v481, %v480
      %v491 = vpack.c.b16 %v483, %v482
      %500 = vmatprep.subr.bf16.mxu0 0
      %501 = vmatpush1.bf16.msra.mxu0 %v484
      %502 = vmatprep.subr.bf16.mxu0 0
      %503 = vmatpush1.bf16.msra.mxu0 %v485
      %504 = vmatprep.subr.bf16.mxu0 0
      %505 = vmatpush1.bf16.msra.mxu0 %v486
      %506 = vmatprep.subr.bf16.mxu0 0
      %507 = vmatpush1.bf16.msra.mxu0 %v487
      %508 = vmatprep.subr.bf16.mxu0 0
      %509 = vmatpush1.bf16.msra.mxu0 %v488
      %510 = vmatprep.subr.bf16.mxu0 0
      %511 = vmatpush1.bf16.msra.mxu0 %v489
      %512 = vmatprep.subr.bf16.mxu0 0
      %513 = vmatpush1.bf16.msra.mxu0 %v490
      %514 = vmatprep.subr.bf16.mxu0 0
      %515 = vmatpush1.bf16.msra.mxu0 %v491
      %516 = vmatprep.subr.bf16.mxu0 0
      %517 = vmatpush1.bf16.msra.mxu0 0
      %518 = vmatprep.subr.bf16.mxu0 0
      %519 = vmatpush1.bf16.msra.mxu0 0
      %520 = vmatprep.subr.bf16.mxu0 0
      %521 = vmatpush1.bf16.msra.mxu0 0
      %522 = vmatprep.subr.bf16.mxu0 0
      %523 = vmatpush1.bf16.msra.mxu0 0
      %524 = vmatprep.subr.bf16.mxu0 0
      %525 = vmatpush1.bf16.msra.mxu0 0
      %526 = vmatprep.subr.bf16.mxu0 0
      %527 = vmatpush1.bf16.msra.mxu0 0
      %528 = vmatprep.subr.bf16.mxu0 0
      %529 = vmatpush1.bf16.msra.mxu0 0
      %530 = vmatprep.subr.bf16.mxu0 0
      %531 = vmatpush1.bf16.msra.mxu0 0
      %532 = vmatprep.mubr.bf16.mxu0 0
      %533 = vmatmul.mubr.bf16.gmra.mrb[0].mxu0 %v421
      %v534 = vpop.f32.mrb[0].mxu0
      %v535 = vadd.f32 %v450, %v534
      %v536 = vpop.f32.mrb[0].mxu0
      %v537 = vpop.f32.mrb[0].mxu0
      %v538 = vadd.f32 %v450, %v537
      %v539 = vpop.f32.mrb[0].mxu0
      %540 = vmatprep.mubr.bf16.mxu0 0
      %541 = vmatmul.mubr.bf16.gmra.mrb[0].mxu0 %v422
      %v542 = vpop.f32.mrb[0].mxu0
      %v543 = vadd.f32 %v450, %v542
      %v544 = vpop.f32.mrb[0].mxu0
      %v545 = vpop.f32.mrb[0].mxu0
      %v546 = vadd.f32 %v450, %v545
      %v547 = vpop.f32.mrb[0].mxu0
      %548 = vmatprep.mubr.bf16.mxu0 0
      %549 = vmatmul.mubr.bf16.gmra.mrb[0].mxu0 %v423
      %v550 = vpop.f32.mrb[0].mxu0
      %v551 = vadd.f32 %v450, %v550
      %v552 = vpop.f32.mrb[0].mxu0
      %v553 = vpop.f32.mrb[0].mxu0
      %v554 = vadd.f32 %v450, %v553
      %v555 = vpop.f32.mrb[0].mxu0
      %556 = vmatprep.mubr.bf16.mxu0 0
      %557 = vmatmul.mubr.bf16.gmra.mrb[0].mxu0 %v424
      %v558 = vpop.f32.mrb[0].mxu0
      %v559 = vadd.f32 %v450, %v558
      %v560 = vpop.f32.mrb[0].mxu0
      %v561 = vpop.f32.mrb[0].mxu0
      %v562 = vadd.f32 %v450, %v561
      %v563 = vpop.f32.mrb[0].mxu0
      %564 = vmatprep.mubr.bf16.mxu0 0
      %565 = vmatmul.mubr.bf16.gmra.mrb[0].mxu0 %v425
      %v566 = vpop.f32.mrb[0].mxu0
      %v567 = vadd.f32 %v450, %v566
      %v568 = vpop.f32.mrb[0].mxu0
      %v569 = vpop.f32.mrb[0].mxu0
      %v570 = vadd.f32 %v450, %v569
      %v571 = vpop.f32.mrb[0].mxu0
      %572 = vmatprep.mubr.bf16.mxu0 0
      %573 = vmatmul.mubr.bf16.gmra.mrb[0].mxu0 %v426
      %v574 = vpop.f32.mrb[0].mxu0
      %v575 = vadd.f32 %v450, %v574
      %v576 = vpop.f32.mrb[0].mxu0
      %v577 = vpop.f32.mrb[0].mxu0
      %v578 = vadd.f32 %v450, %v577
      %v579 = vpop.f32.mrb[0].mxu0
      %580 = vmatprep.mubr.bf16.mxu0 0
      %581 = vmatmul.mubr.bf16.gmra.mrb[0].mxu0 %v427
      %v582 = vpop.f32.mrb[0].mxu0
      %v583 = vadd.f32 %v450, %v582
      %v584 = vpop.f32.mrb[0].mxu0
      %v585 = vpop.f32.mrb[0].mxu0
      %v586 = vadd.f32 %v450, %v585
      %v587 = vpop.f32.mrb[0].mxu0
      %588 = vmatprep.mubr.bf16.mxu0 0
      %589 = vmatmul.mubr.bf16.gmra.mrb[0].mxu0 %v428
      %v590 = vpop.f32.mrb[0].mxu0
      %v591 = vadd.f32 %v450, %v590
      %v592 = vpop.f32.mrb[0].mxu0
      %v593 = vpop.f32.mrb[0].mxu0
      %v594 = vadd.f32 %v450, %v593
      %v595 = vpop.f32.mrb[0].mxu0
      %596 = vdwg.mxu0
      %v597 = vmax.f32 %v535, 0.0
      %v598 = vmax.f32 %v538, 0.0
      %v599 = vmax.f32 %v543, 0.0
      %v600 = vmax.f32 %v546, 0.0
      %v601 = vmax.f32 %v551, 0.0
      %v602 = vmax.f32 %v554, 0.0
      %v603 = vmax.f32 %v559, 0.0
      %v604 = vmax.f32 %v562, 0.0
      %v605 = vmax.f32 %v567, 0.0
      %v606 = vmax.f32 %v570, 0.0
      %v607 = vmax.f32 %v575, 0.0
      %v608 = vmax.f32 %v578, 0.0
      %v609 = vmax.f32 %v583, 0.0
      %v610 = vmax.f32 %v586, 0.0
      %v611 = vmax.f32 %v591, 0.0
      %v612 = vmax.f32 %v594, 0.0
      %v613 = vpack.c.bf16 %v598, %v597
      %v614 = vpack.c.bf16 %v600, %v599
      %v615 = vpack.c.bf16 %v602, %v601
      %v616 = vpack.c.bf16 %v604, %v603
      %v617 = vpack.c.bf16 %v606, %v605
      %v618 = vpack.c.bf16 %v608, %v607
      %v619 = vpack.c.bf16 %v610, %v609
      %v620 = vpack.c.bf16 %v612, %v611
      %s621 = smul.u32 %s24, 128
      %v622 = vlaneseq
      %v623 = vshrl.u32 %v622, 7
      %v624 = vadd.s32 %v623, 8
      %v625 = vadd.s32 %v623, 16
      %v626 = vadd.s32 %v623, 24
      %v627 = vadd.s32 %v623, 32
      %v628 = vadd.s32 %v623, 40
      %v629 = vadd.s32 %v623, 48
      %v630 = vadd.s32 %v623, 56
      %v631 = vadd.s32 %v623, 64
      %v632 = vadd.s32 %v623, 72
      %v633 = vadd.s32 %v623, 80
      %v634 = vadd.s32 %v623, 88
      %v635 = vadd.s32 %v623, 96
      %v636 = vadd.s32 %v623, 104
      %v637 = vadd.s32 %v623, 112
      %v638 = vadd.s32 %v623, 120
      %v639 = vstv %s621
      %v640 = vadd.s32 %v623, %v639
      %v641 = vadd.s32 %v624, %v639
      %v642 = vadd.s32 %v625, %v639
      %v643 = vadd.s32 %v626, %v639
      %v644 = vadd.s32 %v627, %v639
      %v645 = vadd.s32 %v628, %v639
      %v646 = vadd.s32 %v629, %v639
      %v647 = vadd.s32 %v630, %v639
      %v648 = vadd.s32 %v631, %v639
      %v649 = vadd.s32 %v632, %v639
      %v650 = vadd.s32 %v633, %v639
      %v651 = vadd.s32 %v634, %v639
      %v652 = vadd.s32 %v635, %v639
      %v653 = vadd.s32 %v636, %v639
      %v654 = vadd.s32 %v637, %v639
      %v655 = vadd.s32 %v638, %v639
      %v656 = vld [vmem:[%s365] sm:$0x1]
      %v657 = vlaneseq
      %v658 = vshrl.u32 %v657, 7
      %v659 = vsub.s32 0, %v658
      %v660 = vrot.slane %v656, %v659
      %vm661 = vcmp.eq.s32.totalorder %v640, %v660
      %vm662 = vcmp.eq.s32.totalorder %v641, %v660
      %vm663 = vcmp.eq.s32.totalorder %v642, %v660
      %vm664 = vcmp.eq.s32.totalorder %v643, %v660
      %vm665 = vcmp.eq.s32.totalorder %v644, %v660
      %vm666 = vcmp.eq.s32.totalorder %v645, %v660
      %vm667 = vcmp.eq.s32.totalorder %v646, %v660
      %vm668 = vcmp.eq.s32.totalorder %v647, %v660
      %vm669 = vcmp.eq.s32.totalorder %v648, %v660
      %vm670 = vcmp.eq.s32.totalorder %v649, %v660
      %vm671 = vcmp.eq.s32.totalorder %v650, %v660
      %vm672 = vcmp.eq.s32.totalorder %v651, %v660
      %vm673 = vcmp.eq.s32.totalorder %v652, %v660
      %vm674 = vcmp.eq.s32.totalorder %v653, %v660
      %vm675 = vcmp.eq.s32.totalorder %v654, %v660
      %vm676 = vcmp.eq.s32.totalorder %v655, %v660
      %v677 = vsel %vm661, 1, 0
      %v678 = vsel %vm662, 1, 0
      %v679 = vsel %vm663, 1, 0
      %v680 = vsel %vm664, 1, 0
      %v681 = vsel %vm665, 1, 0
      %v682 = vsel %vm666, 1, 0
      %v683 = vsel %vm667, 1, 0
      %v684 = vsel %vm668, 1, 0
      %v685 = vsel %vm669, 1, 0
      %v686 = vsel %vm670, 1, 0
      %v687 = vsel %vm671, 1, 0
      %v688 = vsel %vm672, 1, 0
      %v689 = vsel %vm673, 1, 0
      %v690 = vsel %vm674, 1, 0
      %v691 = vsel %vm675, 1, 0
      %v692 = vsel %vm676, 1, 0
      %v693 = vcvt.s32.f32 %v677
      %v694 = vcvt.s32.f32 %v678
      %v695 = vcvt.s32.f32 %v679
      %v696 = vcvt.s32.f32 %v680
      %v697 = vcvt.s32.f32 %v681
      %v698 = vcvt.s32.f32 %v682
      %v699 = vcvt.s32.f32 %v683
      %v700 = vcvt.s32.f32 %v684
      %v701 = vcvt.s32.f32 %v685
      %v702 = vcvt.s32.f32 %v686
      %v703 = vcvt.s32.f32 %v687
      %v704 = vcvt.s32.f32 %v688
      %v705 = vcvt.s32.f32 %v689
      %v706 = vcvt.s32.f32 %v690
      %v707 = vcvt.s32.f32 %v691
      %v708 = vcvt.s32.f32 %v692
      %v709 = vpack.c.bf16 %v694, %v693
      %v710 = vpack.c.bf16 %v696, %v695
      %v711 = vpack.c.bf16 %v698, %v697
      %v712 = vpack.c.bf16 %v700, %v699
      %v713 = vpack.c.bf16 %v702, %v701
      %v714 = vpack.c.bf16 %v704, %v703
      %v715 = vpack.c.bf16 %v706, %v705
      %v716 = vpack.c.bf16 %v708, %v707
      %v717 = vld [vmem:[#allocation2] sm:$0xff]
      %v718 = vld [vmem:[#allocation2 + $0x8] sm:$0xff]
      %v719 = vld [vmem:[#allocation2 + $0x10] sm:$0xff]
      %v720 = vld [vmem:[#allocation2 + $0x18] sm:$0xff]
      %v721 = vld [vmem:[#allocation2 + $0x20] sm:$0xff]
      %v722 = vld [vmem:[#allocation2 + $0x28] sm:$0xff]
      %v723 = vld [vmem:[#allocation2 + $0x30] sm:$0xff]
      %v724 = vld [vmem:[#allocation2 + $0x38] sm:$0xff]
      %v725 = vld [vmem:[#allocation2 + $0x40] sm:$0xff]
      %v726 = vld [vmem:[#allocation2 + $0x48] sm:$0xff]
      %v727 = vld [vmem:[#allocation2 + $0x50] sm:$0xff]
      %v728 = vld [vmem:[#allocation2 + $0x58] sm:$0xff]
      %v729 = vld [vmem:[#allocation2 + $0x60] sm:$0xff]
      %v730 = vld [vmem:[#allocation2 + $0x68] sm:$0xff]
      %v731 = vld [vmem:[#allocation2 + $0x70] sm:$0xff]
      %v732 = vld [vmem:[#allocation2 + $0x78] sm:$0xff]
      %733 = vmatprep.subr.bf16.mxu0 0
      %734 = vmatpush1.bf16.msra.mxu0 %v613
      %735 = vmatprep.subr.bf16.mxu0 0
      %736 = vmatpush1.bf16.msra.mxu0 %v614
      %737 = vmatprep.subr.bf16.mxu0 0
      %738 = vmatpush1.bf16.msra.mxu0 %v615
      %739 = vmatprep.subr.bf16.mxu0 0
      %740 = vmatpush1.bf16.msra.mxu0 %v616
      %741 = vmatprep.subr.bf16.mxu0 0
      %742 = vmatpush1.bf16.msra.mxu0 %v617
      %743 = vmatprep.subr.bf16.mxu0 0
      %744 = vmatpush1.bf16.msra.mxu0 %v618
      %745 = vmatprep.subr.bf16.mxu0 0
      %746 = vmatpush1.bf16.msra.mxu0 %v619
      %747 = vmatprep.subr.bf16.mxu0 0
      %748 = vmatpush1.bf16.msra.mxu0 %v620
      %749 = vmatprep.subr.bf16.mxu0 0
      %750 = vmatpush1.bf16.msra.mxu0 0
      %751 = vmatprep.subr.bf16.mxu0 0
      %752 = vmatpush1.bf16.msra.mxu0 0
      %753 = vmatprep.subr.bf16.mxu0 0
      %754 = vmatpush1.bf16.msra.mxu0 0
      %755 = vmatprep.subr.bf16.mxu0 0
      %756 = vmatpush1.bf16.msra.mxu0 0
      %757 = vmatprep.subr.bf16.mxu0 0
      %758 = vmatpush1.bf16.msra.mxu0 0
      %759 = vmatprep.subr.bf16.mxu0 0
      %760 = vmatpush1.bf16.msra.mxu0 0
      %761 = vmatprep.subr.bf16.mxu0 0
      %762 = vmatpush1.bf16.msra.mxu0 0
      %763 = vmatprep.subr.bf16.mxu0 0
      %764 = vmatpush1.bf16.msra.mxu0 0
      %765 = vmatprep.mubr.bf16.mxu0 0
      %766 = vmatmul.mubr.bf16.gmra.mrb[0].mxu0 %v709
      %v767 = vpop.f32.mrb[0].mxu0
      %v768 = vadd.f32 0.0, %v767
      %v769 = vpop.f32.mrb[0].mxu0
      %v770 = vpop.f32.mrb[0].mxu0
      %v771 = vadd.f32 0.0, %v770
      %v772 = vpop.f32.mrb[0].mxu0
      %773 = vmatprep.mubr.bf16.mxu0 0
      %774 = vmatmul.mubr.bf16.gmra.mrb[0].mxu0 %v710
      %v775 = vpop.f32.mrb[0].mxu0
      %v776 = vadd.f32 0.0, %v775
      %v777 = vpop.f32.mrb[0].mxu0
      %v778 = vpop.f32.mrb[0].mxu0
      %v779 = vadd.f32 0.0, %v778
      %v780 = vpop.f32.mrb[0].mxu0
      %781 = vmatprep.mubr.bf16.mxu0 0
      %782 = vmatmul.mubr.bf16.gmra.mrb[0].mxu0 %v711
      %v783 = vpop.f32.mrb[0].mxu0
      %v784 = vadd.f32 0.0, %v783
      %v785 = vpop.f32.mrb[0].mxu0
      %v786 = vpop.f32.mrb[0].mxu0
      %v787 = vadd.f32 0.0, %v786
      %v788 = vpop.f32.mrb[0].mxu0
      %789 = vmatprep.mubr.bf16.mxu0 0
      %790 = vmatmul.mubr.bf16.gmra.mrb[0].mxu0 %v712
      %v791 = vpop.f32.mrb[0].mxu0
      %v792 = vadd.f32 0.0, %v791
      %v793 = vpop.f32.mrb[0].mxu0
      %v794 = vpop.f32.mrb[0].mxu0
      %v795 = vadd.f32 0.0, %v794
      %v796 = vpop.f32.mrb[0].mxu0
      %797 = vmatprep.mubr.bf16.mxu0 0
      %798 = vmatmul.mubr.bf16.gmra.mrb[0].mxu0 %v713
      %v799 = vpop.f32.mrb[0].mxu0
      %v800 = vadd.f32 0.0, %v799
      %v801 = vpop.f32.mrb[0].mxu0
      %v802 = vpop.f32.mrb[0].mxu0
      %v803 = vadd.f32 0.0, %v802
      %v804 = vpop.f32.mrb[0].mxu0
      %805 = vmatprep.mubr.bf16.mxu0 0
      %806 = vmatmul.mubr.bf16.gmra.mrb[0].mxu0 %v714
      %v807 = vpop.f32.mrb[0].mxu0
      %v808 = vadd.f32 0.0, %v807
      %v809 = vpop.f32.mrb[0].mxu0
      %v810 = vpop.f32.mrb[0].mxu0
      %v811 = vadd.f32 0.0, %v810
      %v812 = vpop.f32.mrb[0].mxu0
      %813 = vmatprep.mubr.bf16.mxu0 0
      %814 = vmatmul.mubr.bf16.gmra.mrb[0].mxu0 %v715
      %v815 = vpop.f32.mrb[0].mxu0
      %v816 = vadd.f32 0.0, %v815
      %v817 = vpop.f32.mrb[0].mxu0
      %v818 = vpop.f32.mrb[0].mxu0
      %v819 = vadd.f32 0.0, %v818
      %v820 = vpop.f32.mrb[0].mxu0
      %821 = vmatprep.mubr.bf16.mxu0 0
      %822 = vmatmul.mubr.bf16.gmra.mrb[0].mxu0 %v716
      %v823 = vpop.f32.mrb[0].mxu0
      %v824 = vadd.f32 0.0, %v823
      %v825 = vpop.f32.mrb[0].mxu0
      %v826 = vpop.f32.mrb[0].mxu0
      %v827 = vadd.f32 0.0, %v826
      %v828 = vpop.f32.mrb[0].mxu0
      %829 = vdwg.mxu0
      %v830 = vadd.f32 %v717, %v768
      %v831 = vadd.f32 %v718, %v771
      %v832 = vadd.f32 %v719, %v776
      %v833 = vadd.f32 %v720, %v779
      %v834 = vadd.f32 %v721, %v784
      %v835 = vadd.f32 %v722, %v787
      %v836 = vadd.f32 %v723, %v792
      %v837 = vadd.f32 %v724, %v795
      %v838 = vadd.f32 %v725, %v800
      %v839 = vadd.f32 %v726, %v803
      %v840 = vadd.f32 %v727, %v808
      %v841 = vadd.f32 %v728, %v811
      %v842 = vadd.f32 %v729, %v816
      %v843 = vadd.f32 %v730, %v819
      %v844 = vadd.f32 %v731, %v824
      %v845 = vadd.f32 %v732, %v827
      %846 = vst [vmem:[#allocation2] sm:$0xff] %v830
      %847 = vst [vmem:[#allocation2 + $0x8] sm:$0xff] %v831
      %848 = vst [vmem:[#allocation2 + $0x10] sm:$0xff] %v832
      %849 = vst [vmem:[#allocation2 + $0x18] sm:$0xff] %v833
      %850 = vst [vmem:[#allocation2 + $0x20] sm:$0xff] %v834
      %851 = vst [vmem:[#allocation2 + $0x28] sm:$0xff] %v835
      %852 = vst [vmem:[#allocation2 + $0x30] sm:$0xff] %v836
      %853 = vst [vmem:[#allocation2 + $0x38] sm:$0xff] %v837
      %854 = vst [vmem:[#allocation2 + $0x40] sm:$0xff] %v838
      %855 = vst [vmem:[#allocation2 + $0x48] sm:$0xff] %v839
      %856 = vst [vmem:[#allocation2 + $0x50] sm:$0xff] %v840
      %857 = vst [vmem:[#allocation2 + $0x58] sm:$0xff] %v841
      %858 = vst [vmem:[#allocation2 + $0x60] sm:$0xff] %v842
      %859 = vst [vmem:[#allocation2 + $0x68] sm:$0xff] %v843
      %860 = vst [vmem:[#allocation2 + $0x70] sm:$0xff] %v844
      %861 = vst [vmem:[#allocation2 + $0x78] sm:$0xff] %v845
      %p862 = scmp.eq.s32.totalorder %s25, 1
      // Predicated region
      $region61: #{dmpnn_forward.1} parent=55 // pred_check
        %p863 = pneg %p862
      $region62: #{dmpnn_forward.1} parent=55 // pred_check_branch
        %865 = sbr.rel (%p863) target = $region64
      $region63: #{dmpnn_forward.1} parent=55 // pred_region
        %v866 = vld [vmem:[%s376] sm:$0xff]
        %v867 = vld [vmem:[%s376 + $0x8] sm:$0xff]
        %v868 = vld [vmem:[%s376 + $0x10] sm:$0xff]
        %v869 = vld [vmem:[%s376 + $0x18] sm:$0xff]
        %v870 = vld [vmem:[%s376 + $0x20] sm:$0xff]
        %v871 = vld [vmem:[%s376 + $0x28] sm:$0xff]
        %v872 = vld [vmem:[%s376 + $0x30] sm:$0xff]
        %v873 = vld [vmem:[%s376 + $0x38] sm:$0xff]
        %v874 = vld [vmem:[%s376 + $0x40] sm:$0xff]
        %v875 = vld [vmem:[%s376 + $0x48] sm:$0xff]
        %v876 = vld [vmem:[%s376 + $0x50] sm:$0xff]
        %v877 = vld [vmem:[%s376 + $0x58] sm:$0xff]
        %v878 = vld [vmem:[%s376 + $0x60] sm:$0xff]
        %v879 = vld [vmem:[%s376 + $0x68] sm:$0xff]
        %v880 = vld [vmem:[%s376 + $0x70] sm:$0xff]
        %v881 = vld [vmem:[%s376 + $0x78] sm:$0xff]
        %v882 = vpack.c.bf16 %v867, %v866
        %v883 = vpack.c.bf16 %v869, %v868
        %v884 = vpack.c.bf16 %v871, %v870
        %v885 = vpack.c.bf16 %v873, %v872
        %v886 = vpack.c.bf16 %v875, %v874
        %v887 = vpack.c.bf16 %v877, %v876
        %v888 = vpack.c.bf16 %v879, %v878
        %v889 = vpack.c.bf16 %v881, %v880
        %v890 = vld [vmem:[%s7] sm:$0xff]
        %v891 = vld [vmem:[%s7 + $0x8] sm:$0xf]
        %v892 = vld [vmem:[%s7 + $0xc] sm:$0xff]
        %v893 = vld [vmem:[%s7 + $0x14] sm:$0xf]
        %v894 = vld [vmem:[%s7 + $0x18] sm:$0xff]
        %v895 = vld [vmem:[%s7 + $0x20] sm:$0xf]
        %v896 = vld [vmem:[%s7 + $0x24] sm:$0xff]
        %v897 = vld [vmem:[%s7 + $0x2c] sm:$0xf]
        %v898 = vld [vmem:[%s7 + $0x30] sm:$0xff]
        %v899 = vld [vmem:[%s7 + $0x38] sm:$0xf]
        %v900 = vld [vmem:[%s7 + $0x3c] sm:$0xff]
        %v901 = vld [vmem:[%s7 + $0x44] sm:$0xf]
        %v902 = vld [vmem:[%s7 + $0x48] sm:$0xff]
        %v903 = vld [vmem:[%s7 + $0x50] sm:$0xf]
        %v904 = vld [vmem:[%s7 + $0x54] sm:$0xff]
        %v905 = vld [vmem:[%s7 + $0x5c] sm:$0xf]
        %v906 = vld [vmem:[%s7 + $0x60] sm:$0xff]
        %v907 = vld [vmem:[%s7 + $0x68] sm:$0xf]
        %v908 = vld [vmem:[%s7 + $0x6c] sm:$0xff]
        %v909 = vld [vmem:[%s7 + $0x74] sm:$0xf]
        %v910 = vld [vmem:[%s7 + $0x78] sm:$0xff]
        %v911 = vld [vmem:[%s7 + $0x80] sm:$0xf]
        %v912 = vld [vmem:[%s7 + $0x84] sm:$0xff]
        %v913 = vld [vmem:[%s7 + $0x8c] sm:$0xf]
        %v914 = vld [vmem:[%s7 + $0x90] sm:$0xff]
        %v915 = vld [vmem:[%s7 + $0x98] sm:$0xf]
        %v916 = vld [vmem:[%s7 + $0x9c] sm:$0xff]
        %v917 = vld [vmem:[%s7 + $0xa4] sm:$0xf]
        %v918 = vld [vmem:[%s7 + $0xa8] sm:$0xff]
        %v919 = vld [vmem:[%s7 + $0xb0] sm:$0xf]
        %v920 = vld [vmem:[%s7 + $0xb4] sm:$0xff]
        %v921 = vld [vmem:[%s7 + $0xbc] sm:$0xf]
        %v922 = vld [vmem:[%s8] sm:$0x7]
        %v924 = vlaneseq
        %v925 = vshrl.u32 %v924, 7
        %v926 = vsub.s32 0, %v925
        %v927 = vrot.slane %v922, %v926
        %v928 = vlaneseq
        %v929 = vshrl.u32 %v928, 7
        %v930 = vsub.s32 1, %v929
        %v931 = vrot.slane %v922, %v930
        %v932 = vlaneseq
        %v933 = vshrl.u32 %v932, 7
        %v934 = vsub.s32 2, %v933
        %v935 = vrot.slane %v922, %v934
        %v971 = vunpack.c.l.b16 %v890
        %v972 = vunpack.c.h.b16 %v890
        %v973 = vunpack.c.l.b16 %v891
        %v974 = vunpack.c.l.b16 %v892
        %v975 = vunpack.c.h.b16 %v892
        %v976 = vunpack.c.l.b16 %v893
        %v977 = vunpack.c.l.b16 %v894
        %v978 = vunpack.c.h.b16 %v894
        %v979 = vunpack.c.l.b16 %v895
        %v980 = vunpack.c.l.b16 %v896
        %v981 = vunpack.c.h.b16 %v896
        %v982 = vunpack.c.l.b16 %v897
        %v983 = vunpack.c.l.b16 %v898
        %v984 = vunpack.c.h.b16 %v898
        %v985 = vunpack.c.l.b16 %v899
        %v986 = vunpack.c.l.b16 %v900
        %v987 = vunpack.c.h.b16 %v900
        %v988 = vunpack.c.l.b16 %v901
        %v989 = vunpack.c.l.b16 %v902
        %v990 = vunpack.c.h.b16 %v902
        %v991 = vunpack.c.l.b16 %v903
        %v992 = vunpack.c.l.b16 %v904
        %v993 = vunpack.c.h.b16 %v904
        %v994 = vunpack.c.l.b16 %v905
        %v995 = vunpack.c.l.b16 %v906
        %v996 = vunpack.c.h.b16 %v906
        %v997 = vunpack.c.l.b16 %v907
        %v998 = vunpack.c.l.b16 %v908
        %v999 = vunpack.c.h.b16 %v908
        %v1000 = vunpack.c.l.b16 %v909
        %v1001 = vunpack.c.l.b16 %v910
        %v1002 = vunpack.c.h.b16 %v910
        %v1003 = vunpack.c.l.b16 %v911
        %v1004 = vunpack.c.l.b16 %v912
        %v1005 = vunpack.c.h.b16 %v912
        %v1006 = vunpack.c.l.b16 %v913
        %v1007 = vunpack.c.l.b16 %v914
        %v1008 = vunpack.c.h.b16 %v914
        %v1009 = vunpack.c.l.b16 %v915
        %v1010 = vunpack.c.l.b16 %v916
        %v1011 = vunpack.c.h.b16 %v916
        %v1012 = vunpack.c.l.b16 %v917
        %v1013 = vunpack.c.l.b16 %v918
        %v1014 = vunpack.c.h.b16 %v918
        %v1015 = vunpack.c.l.b16 %v919
        %v1016 = vunpack.c.l.b16 %v920
        %v1017 = vunpack.c.h.b16 %v920
        %v1018 = vunpack.c.l.b16 %v921
        %v1019 = vpack.c.b16 %v974, %v971
        %v1020 = vpack.c.b16 %v975, %v972
        %v1021 = vpack.c.b16 %v976, %v973
        %v1022 = vpack.c.b16 %v980, %v977
        %v1023 = vpack.c.b16 %v981, %v978
        %v1024 = vpack.c.b16 %v982, %v979
        %v1025 = vpack.c.b16 %v986, %v983
        %v1026 = vpack.c.b16 %v987, %v984
        %v1027 = vpack.c.b16 %v988, %v985
        %v1028 = vpack.c.b16 %v992, %v989
        %v1029 = vpack.c.b16 %v993, %v990
        %v1030 = vpack.c.b16 %v994, %v991
        %v1031 = vpack.c.b16 %v998, %v995
        %v1032 = vpack.c.b16 %v999, %v996
        %v1033 = vpack.c.b16 %v1000, %v997
        %v1034 = vpack.c.b16 %v1004, %v1001
        %v1035 = vpack.c.b16 %v1005, %v1002
        %v1036 = vpack.c.b16 %v1006, %v1003
        %v1037 = vpack.c.b16 %v1010, %v1007
        %v1038 = vpack.c.b16 %v1011, %v1008
        %v1039 = vpack.c.b16 %v1012, %v1009
        %v1040 = vpack.c.b16 %v1016, %v1013
        %v1041 = vpack.c.b16 %v1017, %v1014
        %v1042 = vpack.c.b16 %v1018, %v1015
        %1067 = vmatprep.subr.bf16.mxu0 %v1020
        %1068 = vmatpush1.bf16.msra.mxu0 %v1019
        %1069 = vmatprep.subr.bf16.mxu0 %v1023
        %1070 = vmatpush1.bf16.msra.mxu0 %v1022
        %1071 = vmatprep.subr.bf16.mxu0 %v1026
        %1072 = vmatpush1.bf16.msra.mxu0 %v1025
        %1073 = vmatprep.subr.bf16.mxu0 %v1029
        %1074 = vmatpush1.bf16.msra.mxu0 %v1028
        %1075 = vmatprep.subr.bf16.mxu0 %v1032
        %1076 = vmatpush1.bf16.msra.mxu0 %v1031
        %1077 = vmatprep.subr.bf16.mxu0 %v1035
        %1078 = vmatpush1.bf16.msra.mxu0 %v1034
        %1079 = vmatprep.subr.bf16.mxu0 %v1038
        %1080 = vmatpush1.bf16.msra.mxu0 %v1037
        %1081 = vmatprep.subr.bf16.mxu0 %v1041
        %1082 = vmatpush1.bf16.msra.mxu0 %v1040
        %1083 = vmatprep.subr.bf16.mxu0 0
        %1084 = vmatpush1.bf16.msra.mxu0 0
        %1085 = vmatprep.subr.bf16.mxu0 0
        %1086 = vmatpush1.bf16.msra.mxu0 0
        %1087 = vmatprep.subr.bf16.mxu0 0
        %1088 = vmatpush1.bf16.msra.mxu0 0
        %1089 = vmatprep.subr.bf16.mxu0 0
        %1090 = vmatpush1.bf16.msra.mxu0 0
        %1091 = vmatprep.subr.bf16.mxu0 0
        %1092 = vmatpush1.bf16.msra.mxu0 0
        %1093 = vmatprep.subr.bf16.mxu0 0
        %1094 = vmatpush1.bf16.msra.mxu0 0
        %1095 = vmatprep.subr.bf16.mxu0 0
        %1096 = vmatpush1.bf16.msra.mxu0 0
        %1097 = vmatprep.subr.bf16.mxu0 0
        %1098 = vmatpush1.bf16.msra.mxu0 0
        %1099 = vmatprep.mubr.bf16.mxu0 0
        %1100 = vmatmul.mubr.bf16.gmra.mrb[0].mxu0 %v882
        %v1101 = vpop.f32.mrb[0].mxu0
        %v1102 = vadd.f32 %v927, %v1101
        %v1103 = vpop.f32.mrb[0].mxu0
        %v1104 = vadd.f32 %v931, %v1103
        %v1105 = vpop.f32.mrb[0].mxu0
        %v1106 = vadd.f32 %v927, %v1105
        %v1107 = vpop.f32.mrb[0].mxu0
        %v1108 = vadd.f32 %v931, %v1107
        %1109 = vmatprep.mubr.bf16.mxu0 0
        %1110 = vmatmul.mubr.bf16.gmra.mrb[0].mxu0 %v883
        %v1111 = vpop.f32.mrb[0].mxu0
        %v1112 = vadd.f32 %v927, %v1111
        %v1113 = vpop.f32.mrb[0].mxu0
        %v1114 = vadd.f32 %v931, %v1113
        %v1115 = vpop.f32.mrb[0].mxu0
        %v1116 = vadd.f32 %v927, %v1115
        %v1117 = vpop.f32.mrb[0].mxu0
        %v1118 = vadd.f32 %v931, %v1117
        %1119 = vmatprep.mubr.bf16.mxu0 0
        %1120 = vmatmul.mubr.bf16.gmra.mrb[0].mxu0 %v884
        %v1121 = vpop.f32.mrb[0].mxu0
        %v1122 = vadd.f32 %v927, %v1121
        %v1123 = vpop.f32.mrb[0].mxu0
        %v1124 = vadd.f32 %v931, %v1123
        %v1125 = vpop.f32.mrb[0].mxu0
        %v1126 = vadd.f32 %v927, %v1125
        %v1127 = vpop.f32.mrb[0].mxu0
        %v1128 = vadd.f32 %v931, %v1127
        %1129 = vmatprep.mubr.bf16.mxu0 0
        %1130 = vmatmul.mubr.bf16.gmra.mrb[0].mxu0 %v885
        %v1131 = vpop.f32.mrb[0].mxu0
        %v1132 = vadd.f32 %v927, %v1131
        %v1133 = vpop.f32.mrb[0].mxu0
        %v1134 = vadd.f32 %v931, %v1133
        %v1135 = vpop.f32.mrb[0].mxu0
        %v1136 = vadd.f32 %v927, %v1135
        %v1137 = vpop.f32.mrb[0].mxu0
        %v1138 = vadd.f32 %v931, %v1137
        %1139 = vmatprep.mubr.bf16.mxu0 0
        %1140 = vmatmul.mubr.bf16.gmra.mrb[0].mxu0 %v886
        %v1141 = vpop.f32.mrb[0].mxu0
        %v1142 = vadd.f32 %v927, %v1141
        %v1143 = vpop.f32.mrb[0].mxu0
        %v1144 = vadd.f32 %v931, %v1143
        %v1145 = vpop.f32.mrb[0].mxu0
        %v1146 = vadd.f32 %v927, %v1145
        %v1147 = vpop.f32.mrb[0].mxu0
        %v1148 = vadd.f32 %v931, %v1147
        %1149 = vmatprep.mubr.bf16.mxu0 0
        %1150 = vmatmul.mubr.bf16.gmra.mrb[0].mxu0 %v887
        %v1151 = vpop.f32.mrb[0].mxu0
        %v1152 = vadd.f32 %v927, %v1151
        %v1153 = vpop.f32.mrb[0].mxu0
        %v1154 = vadd.f32 %v931, %v1153
        %v1155 = vpop.f32.mrb[0].mxu0
        %v1156 = vadd.f32 %v927, %v1155
        %v1157 = vpop.f32.mrb[0].mxu0
        %v1158 = vadd.f32 %v931, %v1157
        %1159 = vmatprep.mubr.bf16.mxu0 0
        %1160 = vmatmul.mubr.bf16.gmra.mrb[0].mxu0 %v888
        %v1161 = vpop.f32.mrb[0].mxu0
        %v1162 = vadd.f32 %v927, %v1161
        %v1163 = vpop.f32.mrb[0].mxu0
        %v1164 = vadd.f32 %v931, %v1163
        %v1165 = vpop.f32.mrb[0].mxu0
        %v1166 = vadd.f32 %v927, %v1165
        %v1167 = vpop.f32.mrb[0].mxu0
        %v1168 = vadd.f32 %v931, %v1167
        %1169 = vmatprep.mubr.bf16.mxu0 0
        %1170 = vmatmul.mubr.bf16.gmra.mrb[0].mxu0 %v889
        %v1171 = vpop.f32.mrb[0].mxu0
        %v1172 = vadd.f32 %v927, %v1171
        %v1173 = vpop.f32.mrb[0].mxu0
        %v1174 = vadd.f32 %v931, %v1173
        %v1175 = vpop.f32.mrb[0].mxu0
        %v1176 = vadd.f32 %v927, %v1175
        %v1177 = vpop.f32.mrb[0].mxu0
        %v1178 = vadd.f32 %v931, %v1177
        %1179 = vdwg.mxu0
        %1180 = vmatprep.subr.bf16.mxu0 0
        %1181 = vmatpush1.bf16.msra.mxu0 %v1021
        %1182 = vmatprep.subr.bf16.mxu0 0
        %1183 = vmatpush1.bf16.msra.mxu0 %v1024
        %1184 = vmatprep.subr.bf16.mxu0 0
        %1185 = vmatpush1.bf16.msra.mxu0 %v1027
        %1186 = vmatprep.subr.bf16.mxu0 0
        %1187 = vmatpush1.bf16.msra.mxu0 %v1030
        %1188 = vmatprep.subr.bf16.mxu0 0
        %1189 = vmatpush1.bf16.msra.mxu0 %v1033
        %1190 = vmatprep.subr.bf16.mxu0 0
        %1191 = vmatpush1.bf16.msra.mxu0 %v1036
        %1192 = vmatprep.subr.bf16.mxu0 0
        %1193 = vmatpush1.bf16.msra.mxu0 %v1039
        %1194 = vmatprep.subr.bf16.mxu0 0
        %1195 = vmatpush1.bf16.msra.mxu0 %v1042
        %1196 = vmatprep.subr.bf16.mxu0 0
        %1197 = vmatpush1.bf16.msra.mxu0 0
        %1198 = vmatprep.subr.bf16.mxu0 0
        %1199 = vmatpush1.bf16.msra.mxu0 0
        %1200 = vmatprep.subr.bf16.mxu0 0
        %1201 = vmatpush1.bf16.msra.mxu0 0
        %1202 = vmatprep.subr.bf16.mxu0 0
        %1203 = vmatpush1.bf16.msra.mxu0 0
        %1204 = vmatprep.subr.bf16.mxu0 0
        %1205 = vmatpush1.bf16.msra.mxu0 0
        %1206 = vmatprep.subr.bf16.mxu0 0
        %1207 = vmatpush1.bf16.msra.mxu0 0
        %1208 = vmatprep.subr.bf16.mxu0 0
        %1209 = vmatpush1.bf16.msra.mxu0 0
        %1210 = vmatprep.subr.bf16.mxu0 0
        %1211 = vmatpush1.bf16.msra.mxu0 0
        %1212 = vmatprep.mubr.bf16.mxu0 0
        %1213 = vmatmul.mubr.bf16.gmra.mrb[0].mxu0 %v882
        %v1214 = vpop.f32.mrb[0].mxu0
        %v1215 = vadd.f32 %v935, %v1214
        %v1216 = vpop.f32.mrb[0].mxu0
        %v1217 = vpop.f32.mrb[0].mxu0
        %v1218 = vadd.f32 %v935, %v1217
        %v1219 = vpop.f32.mrb[0].mxu0
        %1220 = vmatprep.mubr.bf16.mxu0 0
        %1221 = vmatmul.mubr.bf16.gmra.mrb[0].mxu0 %v883
        %v1222 = vpop.f32.mrb[0].mxu0
        %v1223 = vadd.f32 %v935, %v1222
        %v1224 = vpop.f32.mrb[0].mxu0
        %v1225 = vpop.f32.mrb[0].mxu0
        %v1226 = vadd.f32 %v935, %v1225
        %v1227 = vpop.f32.mrb[0].mxu0
        %1228 = vmatprep.mubr.bf16.mxu0 0
        %1229 = vmatmul.mubr.bf16.gmra.mrb[0].mxu0 %v884
        %v1230 = vpop.f32.mrb[0].mxu0
        %v1231 = vadd.f32 %v935, %v1230
        %v1232 = vpop.f32.mrb[0].mxu0
        %v1233 = vpop.f32.mrb[0].mxu0
        %v1234 = vadd.f32 %v935, %v1233
        %v1235 = vpop.f32.mrb[0].mxu0
        %1236 = vmatprep.mubr.bf16.mxu0 0
        %1237 = vmatmul.mubr.bf16.gmra.mrb[0].mxu0 %v885
        %v1238 = vpop.f32.mrb[0].mxu0
        %v1239 = vadd.f32 %v935, %v1238
        %v1240 = vpop.f32.mrb[0].mxu0
        %v1241 = vpop.f32.mrb[0].mxu0
        %v1242 = vadd.f32 %v935, %v1241
        %v1243 = vpop.f32.mrb[0].mxu0
        %1244 = vmatprep.mubr.bf16.mxu0 0
        %1245 = vmatmul.mubr.bf16.gmra.mrb[0].mxu0 %v886
        %v1246 = vpop.f32.mrb[0].mxu0
        %v1247 = vadd.f32 %v935, %v1246
        %v1248 = vpop.f32.mrb[0].mxu0
        %v1249 = vpop.f32.mrb[0].mxu0
        %v1250 = vadd.f32 %v935, %v1249
        %v1251 = vpop.f32.mrb[0].mxu0
        %1252 = vmatprep.mubr.bf16.mxu0 0
        %1253 = vmatmul.mubr.bf16.gmra.mrb[0].mxu0 %v887
        %v1254 = vpop.f32.mrb[0].mxu0
        %v1255 = vadd.f32 %v935, %v1254
        %v1256 = vpop.f32.mrb[0].mxu0
        %v1257 = vpop.f32.mrb[0].mxu0
        %v1258 = vadd.f32 %v935, %v1257
        %v1259 = vpop.f32.mrb[0].mxu0
        %1260 = vmatprep.mubr.bf16.mxu0 0
        %1261 = vmatmul.mubr.bf16.gmra.mrb[0].mxu0 %v888
        %v1262 = vpop.f32.mrb[0].mxu0
        %v1263 = vadd.f32 %v935, %v1262
        %v1264 = vpop.f32.mrb[0].mxu0
        %v1265 = vpop.f32.mrb[0].mxu0
        %v1266 = vadd.f32 %v935, %v1265
        %v1267 = vpop.f32.mrb[0].mxu0
        %1268 = vmatprep.mubr.bf16.mxu0 0
        %1269 = vmatmul.mubr.bf16.gmra.mrb[0].mxu0 %v889
        %v1270 = vpop.f32.mrb[0].mxu0
        %v1271 = vadd.f32 %v935, %v1270
        %v1272 = vpop.f32.mrb[0].mxu0
        %v1273 = vpop.f32.mrb[0].mxu0
        %v1274 = vadd.f32 %v935, %v1273
        %v1275 = vpop.f32.mrb[0].mxu0
        %1276 = vdwg.mxu0
        %v1277 = vld [vmem:[#allocation2] sm:$0xff]
        %v1278 = vld [vmem:[#allocation2 + $0x8] sm:$0xff]
        %v1279 = vld [vmem:[#allocation2 + $0x10] sm:$0xff]
        %v1280 = vld [vmem:[#allocation2 + $0x18] sm:$0xff]
        %v1281 = vld [vmem:[#allocation2 + $0x20] sm:$0xff]
        %v1282 = vld [vmem:[#allocation2 + $0x28] sm:$0xff]
        %v1283 = vld [vmem:[#allocation2 + $0x30] sm:$0xff]
        %v1284 = vld [vmem:[#allocation2 + $0x38] sm:$0xff]
        %v1285 = vld [vmem:[#allocation2 + $0x40] sm:$0xff]
        %v1286 = vld [vmem:[#allocation2 + $0x48] sm:$0xff]
        %v1287 = vld [vmem:[#allocation2 + $0x50] sm:$0xff]
        %v1288 = vld [vmem:[#allocation2 + $0x58] sm:$0xff]
        %v1289 = vld [vmem:[#allocation2 + $0x60] sm:$0xff]
        %v1290 = vld [vmem:[#allocation2 + $0x68] sm:$0xff]
        %v1291 = vld [vmem:[#allocation2 + $0x70] sm:$0xff]
        %v1292 = vld [vmem:[#allocation2 + $0x78] sm:$0xff]
        %v1293 = vpack.c.bf16 %v1278, %v1277
        %v1294 = vpack.c.bf16 %v1280, %v1279
        %v1295 = vpack.c.bf16 %v1282, %v1281
        %v1296 = vpack.c.bf16 %v1284, %v1283
        %v1297 = vpack.c.bf16 %v1286, %v1285
        %v1298 = vpack.c.bf16 %v1288, %v1287
        %v1299 = vpack.c.bf16 %v1290, %v1289
        %v1300 = vpack.c.bf16 %v1292, %v1291
        %v1301 = vld [vmem:[%s5] sm:$0xff]
        %v1302 = vld [vmem:[%s5 + $0x8] sm:$0xf]
        %v1303 = vld [vmem:[%s5 + $0xc] sm:$0xff]
        %v1304 = vld [vmem:[%s5 + $0x14] sm:$0xf]
        %v1305 = vld [vmem:[%s5 + $0x18] sm:$0xff]
        %v1306 = vld [vmem:[%s5 + $0x20] sm:$0xf]
        %v1307 = vld [vmem:[%s5 + $0x24] sm:$0xff]
        %v1308 = vld [vmem:[%s5 + $0x2c] sm:$0xf]
        %v1309 = vld [vmem:[%s5 + $0x30] sm:$0xff]
        %v1310 = vld [vmem:[%s5 + $0x38] sm:$0xf]
        %v1311 = vld [vmem:[%s5 + $0x3c] sm:$0xff]
        %v1312 = vld [vmem:[%s5 + $0x44] sm:$0xf]
        %v1313 = vld [vmem:[%s5 + $0x48] sm:$0xff]
        %v1314 = vld [vmem:[%s5 + $0x50] sm:$0xf]
        %v1315 = vld [vmem:[%s5 + $0x54] sm:$0xff]
        %v1316 = vld [vmem:[%s5 + $0x5c] sm:$0xf]
        %v1317 = vld [vmem:[%s5 + $0x60] sm:$0xff]
        %v1318 = vld [vmem:[%s5 + $0x68] sm:$0xf]
        %v1319 = vld [vmem:[%s5 + $0x6c] sm:$0xff]
        %v1320 = vld [vmem:[%s5 + $0x74] sm:$0xf]
        %v1321 = vld [vmem:[%s5 + $0x78] sm:$0xff]
        %v1322 = vld [vmem:[%s5 + $0x80] sm:$0xf]
        %v1323 = vld [vmem:[%s5 + $0x84] sm:$0xff]
        %v1324 = vld [vmem:[%s5 + $0x8c] sm:$0xf]
        %v1325 = vld [vmem:[%s5 + $0x90] sm:$0xff]
        %v1326 = vld [vmem:[%s5 + $0x98] sm:$0xf]
        %v1327 = vld [vmem:[%s5 + $0x9c] sm:$0xff]
        %v1328 = vld [vmem:[%s5 + $0xa4] sm:$0xf]
        %v1329 = vld [vmem:[%s5 + $0xa8] sm:$0xff]
        %v1330 = vld [vmem:[%s5 + $0xb0] sm:$0xf]
        %v1331 = vld [vmem:[%s5 + $0xb4] sm:$0xff]
        %v1332 = vld [vmem:[%s5 + $0xbc] sm:$0xf]
        %v1333 = vld [vmem:[%s6] sm:$0x7]
        %v1335 = vlaneseq
        %v1336 = vshrl.u32 %v1335, 7
        %v1337 = vsub.s32 0, %v1336
        %v1338 = vrot.slane %v1333, %v1337
        %v1339 = vlaneseq
        %v1340 = vshrl.u32 %v1339, 7
        %v1341 = vsub.s32 1, %v1340
        %v1342 = vrot.slane %v1333, %v1341
        %v1343 = vlaneseq
        %v1344 = vshrl.u32 %v1343, 7
        %v1345 = vsub.s32 2, %v1344
        %v1346 = vrot.slane %v1333, %v1345
        %v1382 = vunpack.c.l.b16 %v1301
        %v1383 = vunpack.c.h.b16 %v1301
        %v1384 = vunpack.c.l.b16 %v1302
        %v1385 = vunpack.c.l.b16 %v1303
        %v1386 = vunpack.c.h.b16 %v1303
        %v1387 = vunpack.c.l.b16 %v1304
        %v1388 = vunpack.c.l.b16 %v1305
        %v1389 = vunpack.c.h.b16 %v1305
        %v1390 = vunpack.c.l.b16 %v1306
        %v1391 = vunpack.c.l.b16 %v1307
        %v1392 = vunpack.c.h.b16 %v1307
        %v1393 = vunpack.c.l.b16 %v1308
        %v1394 = vunpack.c.l.b16 %v1309
        %v1395 = vunpack.c.h.b16 %v1309
        %v1396 = vunpack.c.l.b16 %v1310
        %v1397 = vunpack.c.l.b16 %v1311
        %v1398 = vunpack.c.h.b16 %v1311
        %v1399 = vunpack.c.l.b16 %v1312
        %v1400 = vunpack.c.l.b16 %v1313
        %v1401 = vunpack.c.h.b16 %v1313
        %v1402 = vunpack.c.l.b16 %v1314
        %v1403 = vunpack.c.l.b16 %v1315
        %v1404 = vunpack.c.h.b16 %v1315
        %v1405 = vunpack.c.l.b16 %v1316
        %v1406 = vunpack.c.l.b16 %v1317
        %v1407 = vunpack.c.h.b16 %v1317
        %v1408 = vunpack.c.l.b16 %v1318
        %v1409 = vunpack.c.l.b16 %v1319
        %v1410 = vunpack.c.h.b16 %v1319
        %v1411 = vunpack.c.l.b16 %v1320
        %v1412 = vunpack.c.l.b16 %v1321
        %v1413 = vunpack.c.h.b16 %v1321
        %v1414 = vunpack.c.l.b16 %v1322
        %v1415 = vunpack.c.l.b16 %v1323
        %v1416 = vunpack.c.h.b16 %v1323
        %v1417 = vunpack.c.l.b16 %v1324
        %v1418 = vunpack.c.l.b16 %v1325
        %v1419 = vunpack.c.h.b16 %v1325
        %v1420 = vunpack.c.l.b16 %v1326
        %v1421 = vunpack.c.l.b16 %v1327
        %v1422 = vunpack.c.h.b16 %v1327
        %v1423 = vunpack.c.l.b16 %v1328
        %v1424 = vunpack.c.l.b16 %v1329
        %v1425 = vunpack.c.h.b16 %v1329
        %v1426 = vunpack.c.l.b16 %v1330
        %v1427 = vunpack.c.l.b16 %v1331
        %v1428 = vunpack.c.h.b16 %v1331
        %v1429 = vunpack.c.l.b16 %v1332
        %v1430 = vpack.c.b16 %v1385, %v1382
        %v1431 = vpack.c.b16 %v1386, %v1383
        %v1432 = vpack.c.b16 %v1387, %v1384
        %v1433 = vpack.c.b16 %v1391, %v1388
        %v1434 = vpack.c.b16 %v1392, %v1389
        %v1435 = vpack.c.b16 %v1393, %v1390
        %v1436 = vpack.c.b16 %v1397, %v1394
        %v1437 = vpack.c.b16 %v1398, %v1395
        %v1438 = vpack.c.b16 %v1399, %v1396
        %v1439 = vpack.c.b16 %v1403, %v1400
        %v1440 = vpack.c.b16 %v1404, %v1401
        %v1441 = vpack.c.b16 %v1405, %v1402
        %v1442 = vpack.c.b16 %v1409, %v1406
        %v1443 = vpack.c.b16 %v1410, %v1407
        %v1444 = vpack.c.b16 %v1411, %v1408
        %v1445 = vpack.c.b16 %v1415, %v1412
        %v1446 = vpack.c.b16 %v1416, %v1413
        %v1447 = vpack.c.b16 %v1417, %v1414
        %v1448 = vpack.c.b16 %v1421, %v1418
        %v1449 = vpack.c.b16 %v1422, %v1419
        %v1450 = vpack.c.b16 %v1423, %v1420
        %v1451 = vpack.c.b16 %v1427, %v1424
        %v1452 = vpack.c.b16 %v1428, %v1425
        %v1453 = vpack.c.b16 %v1429, %v1426
        %1478 = vmatprep.subr.bf16.mxu0 %v1431
        %1479 = vmatpush1.bf16.msra.mxu0 %v1430
        %1480 = vmatprep.subr.bf16.mxu0 %v1434
        %1481 = vmatpush1.bf16.msra.mxu0 %v1433
        %1482 = vmatprep.subr.bf16.mxu0 %v1437
        %1483 = vmatpush1.bf16.msra.mxu0 %v1436
        %1484 = vmatprep.subr.bf16.mxu0 %v1440
        %1485 = vmatpush1.bf16.msra.mxu0 %v1439
        %1486 = vmatprep.subr.bf16.mxu0 %v1443
        %1487 = vmatpush1.bf16.msra.mxu0 %v1442
        %1488 = vmatprep.subr.bf16.mxu0 %v1446
        %1489 = vmatpush1.bf16.msra.mxu0 %v1445
        %1490 = vmatprep.subr.bf16.mxu0 %v1449
        %1491 = vmatpush1.bf16.msra.mxu0 %v1448
        %1492 = vmatprep.subr.bf16.mxu0 %v1452
        %1493 = vmatpush1.bf16.msra.mxu0 %v1451
        %1494 = vmatprep.subr.bf16.mxu0 0
        %1495 = vmatpush1.bf16.msra.mxu0 0
        %1496 = vmatprep.subr.bf16.mxu0 0
        %1497 = vmatpush1.bf16.msra.mxu0 0
        %1498 = vmatprep.subr.bf16.mxu0 0
        %1499 = vmatpush1.bf16.msra.mxu0 0
        %1500 = vmatprep.subr.bf16.mxu0 0
        %1501 = vmatpush1.bf16.msra.mxu0 0
        %1502 = vmatprep.subr.bf16.mxu0 0
        %1503 = vmatpush1.bf16.msra.mxu0 0
        %1504 = vmatprep.subr.bf16.mxu0 0
        %1505 = vmatpush1.bf16.msra.mxu0 0
        %1506 = vmatprep.subr.bf16.mxu0 0
        %1507 = vmatpush1.bf16.msra.mxu0 0
        %1508 = vmatprep.subr.bf16.mxu0 0
        %1509 = vmatpush1.bf16.msra.mxu0 0
        %1510 = vmatprep.mubr.bf16.mxu0 0
        %1511 = vmatmul.mubr.bf16.gmra.mrb[0].mxu0 %v1293
        %v1512 = vpop.f32.mrb[0].mxu0
        %v1513 = vadd.f32 %v1338, %v1512
        %v1514 = vpop.f32.mrb[0].mxu0
        %v1515 = vadd.f32 %v1342, %v1514
        %v1516 = vpop.f32.mrb[0].mxu0
        %v1517 = vadd.f32 %v1338, %v1516
        %v1518 = vpop.f32.mrb[0].mxu0
        %v1519 = vadd.f32 %v1342, %v1518
        %1520 = vmatprep.mubr.bf16.mxu0 0
        %1521 = vmatmul.mubr.bf16.gmra.mrb[0].mxu0 %v1294
        %v1522 = vpop.f32.mrb[0].mxu0
        %v1523 = vadd.f32 %v1338, %v1522
        %v1524 = vpop.f32.mrb[0].mxu0
        %v1525 = vadd.f32 %v1342, %v1524
        %v1526 = vpop.f32.mrb[0].mxu0
        %v1527 = vadd.f32 %v1338, %v1526
        %v1528 = vpop.f32.mrb[0].mxu0
        %v1529 = vadd.f32 %v1342, %v1528
        %1530 = vmatprep.mubr.bf16.mxu0 0
        %1531 = vmatmul.mubr.bf16.gmra.mrb[0].mxu0 %v1295
        %v1532 = vpop.f32.mrb[0].mxu0
        %v1533 = vadd.f32 %v1338, %v1532
        %v1534 = vpop.f32.mrb[0].mxu0
        %v1535 = vadd.f32 %v1342, %v1534
        %v1536 = vpop.f32.mrb[0].mxu0
        %v1537 = vadd.f32 %v1338, %v1536
        %v1538 = vpop.f32.mrb[0].mxu0
        %v1539 = vadd.f32 %v1342, %v1538
        %1540 = vmatprep.mubr.bf16.mxu0 0
        %1541 = vmatmul.mubr.bf16.gmra.mrb[0].mxu0 %v1296
        %v1542 = vpop.f32.mrb[0].mxu0
        %v1543 = vadd.f32 %v1338, %v1542
        %v1544 = vpop.f32.mrb[0].mxu0
        %v1545 = vadd.f32 %v1342, %v1544
        %v1546 = vpop.f32.mrb[0].mxu0
        %v1547 = vadd.f32 %v1338, %v1546
        %v1548 = vpop.f32.mrb[0].mxu0
        %v1549 = vadd.f32 %v1342, %v1548
        %1550 = vmatprep.mubr.bf16.mxu0 0
        %1551 = vmatmul.mubr.bf16.gmra.mrb[0].mxu0 %v1297
        %v1552 = vpop.f32.mrb[0].mxu0
        %v1553 = vadd.f32 %v1338, %v1552
        %v1554 = vpop.f32.mrb[0].mxu0
        %v1555 = vadd.f32 %v1342, %v1554
        %v1556 = vpop.f32.mrb[0].mxu0
        %v1557 = vadd.f32 %v1338, %v1556
        %v1558 = vpop.f32.mrb[0].mxu0
        %v1559 = vadd.f32 %v1342, %v1558
        %1560 = vmatprep.mubr.bf16.mxu0 0
        %1561 = vmatmul.mubr.bf16.gmra.mrb[0].mxu0 %v1298
        %v1562 = vpop.f32.mrb[0].mxu0
        %v1563 = vadd.f32 %v1338, %v1562
        %v1564 = vpop.f32.mrb[0].mxu0
        %v1565 = vadd.f32 %v1342, %v1564
        %v1566 = vpop.f32.mrb[0].mxu0
        %v1567 = vadd.f32 %v1338, %v1566
        %v1568 = vpop.f32.mrb[0].mxu0
        %v1569 = vadd.f32 %v1342, %v1568
        %1570 = vmatprep.mubr.bf16.mxu0 0
        %1571 = vmatmul.mubr.bf16.gmra.mrb[0].mxu0 %v1299
        %v1572 = vpop.f32.mrb[0].mxu0
        %v1573 = vadd.f32 %v1338, %v1572
        %v1574 = vpop.f32.mrb[0].mxu0
        %v1575 = vadd.f32 %v1342, %v1574
        %v1576 = vpop.f32.mrb[0].mxu0
        %v1577 = vadd.f32 %v1338, %v1576
        %v1578 = vpop.f32.mrb[0].mxu0
        %v1579 = vadd.f32 %v1342, %v1578
        %1580 = vmatprep.mubr.bf16.mxu0 0
        %1581 = vmatmul.mubr.bf16.gmra.mrb[0].mxu0 %v1300
        %v1582 = vpop.f32.mrb[0].mxu0
        %v1583 = vadd.f32 %v1338, %v1582
        %v1584 = vpop.f32.mrb[0].mxu0
        %v1585 = vadd.f32 %v1342, %v1584
        %v1586 = vpop.f32.mrb[0].mxu0
        %v1587 = vadd.f32 %v1338, %v1586
        %v1588 = vpop.f32.mrb[0].mxu0
        %v1589 = vadd.f32 %v1342, %v1588
        %1590 = vdwg.mxu0
        %1591 = vmatprep.subr.bf16.mxu0 0
        %1592 = vmatpush1.bf16.msra.mxu0 %v1432
        %1593 = vmatprep.subr.bf16.mxu0 0
        %1594 = vmatpush1.bf16.msra.mxu0 %v1435
        %1595 = vmatprep.subr.bf16.mxu0 0
        %1596 = vmatpush1.bf16.msra.mxu0 %v1438
        %1597 = vmatprep.subr.bf16.mxu0 0
        %1598 = vmatpush1.bf16.msra.mxu0 %v1441
        %1599 = vmatprep.subr.bf16.mxu0 0
        %1600 = vmatpush1.bf16.msra.mxu0 %v1444
        %1601 = vmatprep.subr.bf16.mxu0 0
        %1602 = vmatpush1.bf16.msra.mxu0 %v1447
        %1603 = vmatprep.subr.bf16.mxu0 0
        %1604 = vmatpush1.bf16.msra.mxu0 %v1450
        %1605 = vmatprep.subr.bf16.mxu0 0
        %1606 = vmatpush1.bf16.msra.mxu0 %v1453
        %1607 = vmatprep.subr.bf16.mxu0 0
        %1608 = vmatpush1.bf16.msra.mxu0 0
        %1609 = vmatprep.subr.bf16.mxu0 0
        %1610 = vmatpush1.bf16.msra.mxu0 0
        %1611 = vmatprep.subr.bf16.mxu0 0
        %1612 = vmatpush1.bf16.msra.mxu0 0
        %1613 = vmatprep.subr.bf16.mxu0 0
        %1614 = vmatpush1.bf16.msra.mxu0 0
        %1615 = vmatprep.subr.bf16.mxu0 0
        %1616 = vmatpush1.bf16.msra.mxu0 0
        %1617 = vmatprep.subr.bf16.mxu0 0
        %1618 = vmatpush1.bf16.msra.mxu0 0
        %1619 = vmatprep.subr.bf16.mxu0 0
        %1620 = vmatpush1.bf16.msra.mxu0 0
        %1621 = vmatprep.subr.bf16.mxu0 0
        %1622 = vmatpush1.bf16.msra.mxu0 0
        %1623 = vmatprep.mubr.bf16.mxu0 0
        %1624 = vmatmul.mubr.bf16.gmra.mrb[0].mxu0 %v1293
        %v1625 = vpop.f32.mrb[0].mxu0
        %v1626 = vadd.f32 %v1346, %v1625
        %v1627 = vpop.f32.mrb[0].mxu0
        %v1628 = vpop.f32.mrb[0].mxu0
        %v1629 = vadd.f32 %v1346, %v1628
        %v1630 = vpop.f32.mrb[0].mxu0
        %1631 = vmatprep.mubr.bf16.mxu0 0
        %1632 = vmatmul.mubr.bf16.gmra.mrb[0].mxu0 %v1294
        %v1633 = vpop.f32.mrb[0].mxu0
        %v1634 = vadd.f32 %v1346, %v1633
        %v1635 = vpop.f32.mrb[0].mxu0
        %v1636 = vpop.f32.mrb[0].mxu0
        %v1637 = vadd.f32 %v1346, %v1636
        %v1638 = vpop.f32.mrb[0].mxu0
        %1639 = vmatprep.mubr.bf16.mxu0 0
        %1640 = vmatmul.mubr.bf16.gmra.mrb[0].mxu0 %v1295
        %v1641 = vpop.f32.mrb[0].mxu0
        %v1642 = vadd.f32 %v1346, %v1641
        %v1643 = vpop.f32.mrb[0].mxu0
        %v1644 = vpop.f32.mrb[0].mxu0
        %v1645 = vadd.f32 %v1346, %v1644
        %v1646 = vpop.f32.mrb[0].mxu0
        %1647 = vmatprep.mubr.bf16.mxu0 0
        %1648 = vmatmul.mubr.bf16.gmra.mrb[0].mxu0 %v1296
        %v1649 = vpop.f32.mrb[0].mxu0
        %v1650 = vadd.f32 %v1346, %v1649
        %v1651 = vpop.f32.mrb[0].mxu0
        %v1652 = vpop.f32.mrb[0].mxu0
        %v1653 = vadd.f32 %v1346, %v1652
        %v1654 = vpop.f32.mrb[0].mxu0
        %1655 = vmatprep.mubr.bf16.mxu0 0
        %1656 = vmatmul.mubr.bf16.gmra.mrb[0].mxu0 %v1297
        %v1657 = vpop.f32.mrb[0].mxu0
        %v1658 = vadd.f32 %v1346, %v1657
        %v1659 = vpop.f32.mrb[0].mxu0
        %v1660 = vpop.f32.mrb[0].mxu0
        %v1661 = vadd.f32 %v1346, %v1660
        %v1662 = vpop.f32.mrb[0].mxu0
        %1663 = vmatprep.mubr.bf16.mxu0 0
        %1664 = vmatmul.mubr.bf16.gmra.mrb[0].mxu0 %v1298
        %v1665 = vpop.f32.mrb[0].mxu0
        %v1666 = vadd.f32 %v1346, %v1665
        %v1667 = vpop.f32.mrb[0].mxu0
        %v1668 = vpop.f32.mrb[0].mxu0
        %v1669 = vadd.f32 %v1346, %v1668
        %v1670 = vpop.f32.mrb[0].mxu0
        %1671 = vmatprep.mubr.bf16.mxu0 0
        %1672 = vmatmul.mubr.bf16.gmra.mrb[0].mxu0 %v1299
        %v1673 = vpop.f32.mrb[0].mxu0
        %v1674 = vadd.f32 %v1346, %v1673
        %v1675 = vpop.f32.mrb[0].mxu0
        %v1676 = vpop.f32.mrb[0].mxu0
        %v1677 = vadd.f32 %v1346, %v1676
        %v1678 = vpop.f32.mrb[0].mxu0
        %1679 = vmatprep.mubr.bf16.mxu0 0
        %1680 = vmatmul.mubr.bf16.gmra.mrb[0].mxu0 %v1300
        %v1681 = vpop.f32.mrb[0].mxu0
        %v1682 = vadd.f32 %v1346, %v1681
        %v1683 = vpop.f32.mrb[0].mxu0
        %v1684 = vpop.f32.mrb[0].mxu0
        %v1685 = vadd.f32 %v1346, %v1684
        %v1686 = vpop.f32.mrb[0].mxu0
        %1687 = vdwg.mxu0
        %v1688 = vadd.f32 %v1513, %v1102
        %v1689 = vadd.f32 %v1517, %v1106
        %v1690 = vadd.f32 %v1523, %v1112
        %v1691 = vadd.f32 %v1527, %v1116
        %v1692 = vadd.f32 %v1533, %v1122
        %v1693 = vadd.f32 %v1537, %v1126
        %v1694 = vadd.f32 %v1543, %v1132
        %v1695 = vadd.f32 %v1547, %v1136
        %v1696 = vadd.f32 %v1553, %v1142
        %v1697 = vadd.f32 %v1557, %v1146
        %v1698 = vadd.f32 %v1563, %v1152
        %v1699 = vadd.f32 %v1567, %v1156
        %v1700 = vadd.f32 %v1573, %v1162
        %v1701 = vadd.f32 %v1577, %v1166
        %v1702 = vadd.f32 %v1583, %v1172
        %v1703 = vadd.f32 %v1587, %v1176
        %v1704 = vxor.u32 %v1688, 2147483648
        %v1705 = vxor.u32 %v1689, 2147483648
        %v1706 = vxor.u32 %v1690, 2147483648
        %v1707 = vxor.u32 %v1691, 2147483648
        %v1708 = vxor.u32 %v1692, 2147483648
        %v1709 = vxor.u32 %v1693, 2147483648
        %v1710 = vxor.u32 %v1694, 2147483648
        %v1711 = vxor.u32 %v1695, 2147483648
        %v1712 = vxor.u32 %v1696, 2147483648
        %v1713 = vxor.u32 %v1697, 2147483648
        %v1714 = vxor.u32 %v1698, 2147483648
        %v1715 = vxor.u32 %v1699, 2147483648
        %v1716 = vxor.u32 %v1700, 2147483648
        %v1717 = vxor.u32 %v1701, 2147483648
        %v1718 = vxor.u32 %v1702, 2147483648
        %v1719 = vxor.u32 %v1703, 2147483648
        %v1720 = vmul.f32 %v1704, 1.442695
        %v1721 = vpow.pop %v1720
        %v1722 = vmul.f32 %v1705, 1.442695
        %v1723 = vpow.pop %v1722
        %v1724 = vmul.f32 %v1706, 1.442695
        %v1725 = vpow.pop %v1724
        %v1726 = vmul.f32 %v1707, 1.442695
        %v1727 = vpow.pop %v1726
        %v1728 = vmul.f32 %v1708, 1.442695
        %v1729 = vpow.pop %v1728
        %v1730 = vmul.f32 %v1709, 1.442695
        %v1731 = vpow.pop %v1730
        %v1732 = vmul.f32 %v1710, 1.442695
        %v1733 = vpow.pop %v1732
        %v1734 = vmul.f32 %v1711, 1.442695
        %v1735 = vpow.pop %v1734
        %v1736 = vmul.f32 %v1712, 1.442695
        %v1737 = vpow.pop %v1736
        %v1738 = vmul.f32 %v1713, 1.442695
        %v1739 = vpow.pop %v1738
        %v1740 = vmul.f32 %v1714, 1.442695
        %v1741 = vpow.pop %v1740
        %v1742 = vmul.f32 %v1715, 1.442695
        %v1743 = vpow.pop %v1742
        %v1744 = vmul.f32 %v1716, 1.442695
        %v1745 = vpow.pop %v1744
        %v1746 = vmul.f32 %v1717, 1.442695
        %v1747 = vpow.pop %v1746
        %v1748 = vmul.f32 %v1718, 1.442695
        %v1749 = vpow.pop %v1748
        %v1750 = vmul.f32 %v1719, 1.442695
        %v1751 = vpow.pop %v1750
        %v1752 = vadd.f32 %v1721, 1.0
        %v1753 = vadd.f32 %v1723, 1.0
        %v1754 = vadd.f32 %v1725, 1.0
        %v1755 = vadd.f32 %v1727, 1.0
        %v1756 = vadd.f32 %v1729, 1.0
        %v1757 = vadd.f32 %v1731, 1.0
        %v1758 = vadd.f32 %v1733, 1.0
        %v1759 = vadd.f32 %v1735, 1.0
        %v1760 = vadd.f32 %v1737, 1.0
        %v1761 = vadd.f32 %v1739, 1.0
        %v1762 = vadd.f32 %v1741, 1.0
        %v1763 = vadd.f32 %v1743, 1.0
        %v1764 = vadd.f32 %v1745, 1.0
        %v1765 = vadd.f32 %v1747, 1.0
        %v1766 = vadd.f32 %v1749, 1.0
        %v1767 = vadd.f32 %v1751, 1.0
        %v1768 = vrcp.pop %v1752
        %v1769 = vmul.f32 1.0, %v1768
        %v1770 = vrcp.pop %v1753
        %v1771 = vmul.f32 1.0, %v1770
        %v1772 = vrcp.pop %v1754
        %v1773 = vmul.f32 1.0, %v1772
        %v1774 = vrcp.pop %v1755
        %v1775 = vmul.f32 1.0, %v1774
        %v1776 = vrcp.pop %v1756
        %v1777 = vmul.f32 1.0, %v1776
        %v1778 = vrcp.pop %v1757
        %v1779 = vmul.f32 1.0, %v1778
        %v1780 = vrcp.pop %v1758
        %v1781 = vmul.f32 1.0, %v1780
        %v1782 = vrcp.pop %v1759
        %v1783 = vmul.f32 1.0, %v1782
        %v1784 = vrcp.pop %v1760
        %v1785 = vmul.f32 1.0, %v1784
        %v1786 = vrcp.pop %v1761
        %v1787 = vmul.f32 1.0, %v1786
        %v1788 = vrcp.pop %v1762
        %v1789 = vmul.f32 1.0, %v1788
        %v1790 = vrcp.pop %v1763
        %v1791 = vmul.f32 1.0, %v1790
        %v1792 = vrcp.pop %v1764
        %v1793 = vmul.f32 1.0, %v1792
        %v1794 = vrcp.pop %v1765
        %v1795 = vmul.f32 1.0, %v1794
        %v1796 = vrcp.pop %v1766
        %v1797 = vmul.f32 1.0, %v1796
        %v1798 = vrcp.pop %v1767
        %v1799 = vmul.f32 1.0, %v1798
        %v1800 = vadd.f32 %v1515, %v1104
        %v1801 = vadd.f32 %v1519, %v1108
        %v1802 = vadd.f32 %v1525, %v1114
        %v1803 = vadd.f32 %v1529, %v1118
        %v1804 = vadd.f32 %v1535, %v1124
        %v1805 = vadd.f32 %v1539, %v1128
        %v1806 = vadd.f32 %v1545, %v1134
        %v1807 = vadd.f32 %v1549, %v1138
        %v1808 = vadd.f32 %v1555, %v1144
        %v1809 = vadd.f32 %v1559, %v1148
        %v1810 = vadd.f32 %v1565, %v1154
        %v1811 = vadd.f32 %v1569, %v1158
        %v1812 = vadd.f32 %v1575, %v1164
        %v1813 = vadd.f32 %v1579, %v1168
        %v1814 = vadd.f32 %v1585, %v1174
        %v1815 = vadd.f32 %v1589, %v1178
        %v1816 = vxor.u32 %v1800, 2147483648
        %v1817 = vxor.u32 %v1801, 2147483648
        %v1818 = vxor.u32 %v1802, 2147483648
        %v1819 = vxor.u32 %v1803, 2147483648
        %v1820 = vxor.u32 %v1804, 2147483648
        %v1821 = vxor.u32 %v1805, 2147483648
        %v1822 = vxor.u32 %v1806, 2147483648
        %v1823 = vxor.u32 %v1807, 2147483648
        %v1824 = vxor.u32 %v1808, 2147483648
        %v1825 = vxor.u32 %v1809, 2147483648
        %v1826 = vxor.u32 %v1810, 2147483648
        %v1827 = vxor.u32 %v1811, 2147483648
        %v1828 = vxor.u32 %v1812, 2147483648
        %v1829 = vxor.u32 %v1813, 2147483648
        %v1830 = vxor.u32 %v1814, 2147483648
        %v1831 = vxor.u32 %v1815, 2147483648
        %v1832 = vmul.f32 %v1816, 1.442695
        %v1833 = vpow.pop %v1832
        %v1834 = vmul.f32 %v1817, 1.442695
        %v1835 = vpow.pop %v1834
        %v1836 = vmul.f32 %v1818, 1.442695
        %v1837 = vpow.pop %v1836
        %v1838 = vmul.f32 %v1819, 1.442695
        %v1839 = vpow.pop %v1838
        %v1840 = vmul.f32 %v1820, 1.442695
        %v1841 = vpow.pop %v1840
        %v1842 = vmul.f32 %v1821, 1.442695
        %v1843 = vpow.pop %v1842
        %v1844 = vmul.f32 %v1822, 1.442695
        %v1845 = vpow.pop %v1844
        %v1846 = vmul.f32 %v1823, 1.442695
        %v1847 = vpow.pop %v1846
        %v1848 = vmul.f32 %v1824, 1.442695
        %v1849 = vpow.pop %v1848
        %v1850 = vmul.f32 %v1825, 1.442695
        %v1851 = vpow.pop %v1850
        %v1852 = vmul.f32 %v1826, 1.442695
        %v1853 = vpow.pop %v1852
        %v1854 = vmul.f32 %v1827, 1.442695
        %v1855 = vpow.pop %v1854
        %v1856 = vmul.f32 %v1828, 1.442695
        %v1857 = vpow.pop %v1856
        %v1858 = vmul.f32 %v1829, 1.442695
        %v1859 = vpow.pop %v1858
        %v1860 = vmul.f32 %v1830, 1.442695
        %v1861 = vpow.pop %v1860
        %v1862 = vmul.f32 %v1831, 1.442695
        %v1863 = vpow.pop %v1862
        %v1864 = vadd.f32 %v1833, 1.0
        %v1865 = vadd.f32 %v1835, 1.0
        %v1866 = vadd.f32 %v1837, 1.0
        %v1867 = vadd.f32 %v1839, 1.0
        %v1868 = vadd.f32 %v1841, 1.0
        %v1869 = vadd.f32 %v1843, 1.0
        %v1870 = vadd.f32 %v1845, 1.0
        %v1871 = vadd.f32 %v1847, 1.0
        %v1872 = vadd.f32 %v1849, 1.0
        %v1873 = vadd.f32 %v1851, 1.0
        %v1874 = vadd.f32 %v1853, 1.0
        %v1875 = vadd.f32 %v1855, 1.0
        %v1876 = vadd.f32 %v1857, 1.0
        %v1877 = vadd.f32 %v1859, 1.0
        %v1878 = vadd.f32 %v1861, 1.0
        %v1879 = vadd.f32 %v1863, 1.0
        %v1880 = vrcp.pop %v1864
        %v1881 = vmul.f32 1.0, %v1880
        %v1882 = vrcp.pop %v1865
        %v1883 = vmul.f32 1.0, %v1882
        %v1884 = vrcp.pop %v1866
        %v1885 = vmul.f32 1.0, %v1884
        %v1886 = vrcp.pop %v1867
        %v1887 = vmul.f32 1.0, %v1886
        %v1888 = vrcp.pop %v1868
        %v1889 = vmul.f32 1.0, %v1888
        %v1890 = vrcp.pop %v1869
        %v1891 = vmul.f32 1.0, %v1890
        %v1892 = vrcp.pop %v1870
        %v1893 = vmul.f32 1.0, %v1892
        %v1894 = vrcp.pop %v1871
        %v1895 = vmul.f32 1.0, %v1894
        %v1896 = vrcp.pop %v1872
        %v1897 = vmul.f32 1.0, %v1896
        %v1898 = vrcp.pop %v1873
        %v1899 = vmul.f32 1.0, %v1898
        %v1900 = vrcp.pop %v1874
        %v1901 = vmul.f32 1.0, %v1900
        %v1902 = vrcp.pop %v1875
        %v1903 = vmul.f32 1.0, %v1902
        %v1904 = vrcp.pop %v1876
        %v1905 = vmul.f32 1.0, %v1904
        %v1906 = vrcp.pop %v1877
        %v1907 = vmul.f32 1.0, %v1906
        %v1908 = vrcp.pop %v1878
        %v1909 = vmul.f32 1.0, %v1908
        %v1910 = vrcp.pop %v1879
        %v1911 = vmul.f32 1.0, %v1910
        %v1912 = vmul.f32 %v1769, %v1215
        %v1913 = vmul.f32 %v1771, %v1218
        %v1914 = vmul.f32 %v1773, %v1223
        %v1915 = vmul.f32 %v1775, %v1226
        %v1916 = vmul.f32 %v1777, %v1231
        %v1917 = vmul.f32 %v1779, %v1234
        %v1918 = vmul.f32 %v1781, %v1239
        %v1919 = vmul.f32 %v1783, %v1242
        %v1920 = vmul.f32 %v1785, %v1247
        %v1921 = vmul.f32 %v1787, %v1250
        %v1922 = vmul.f32 %v1789, %v1255
        %v1923 = vmul.f32 %v1791, %v1258
        %v1924 = vmul.f32 %v1793, %v1263
        %v1925 = vmul.f32 %v1795, %v1266
        %v1926 = vmul.f32 %v1797, %v1271
        %v1927 = vmul.f32 %v1799, %v1274
        %v1928 = vadd.f32 %v1626, %v1912
        %v1929 = vadd.f32 %v1629, %v1913
        %v1930 = vadd.f32 %v1634, %v1914
        %v1931 = vadd.f32 %v1637, %v1915
        %v1932 = vadd.f32 %v1642, %v1916
        %v1933 = vadd.f32 %v1645, %v1917
        %v1934 = vadd.f32 %v1650, %v1918
        %v1935 = vadd.f32 %v1653, %v1919
        %v1936 = vadd.f32 %v1658, %v1920
        %v1937 = vadd.f32 %v1661, %v1921
        %v1938 = vadd.f32 %v1666, %v1922
        %v1939 = vadd.f32 %v1669, %v1923
        %v1940 = vadd.f32 %v1674, %v1924
        %v1941 = vadd.f32 %v1677, %v1925
        %v1942 = vadd.f32 %v1682, %v1926
        %v1943 = vadd.f32 %v1685, %v1927
        %v1944 = vtanh.pop %v1928
        %v1945 = vtanh.pop %v1929
        %v1946 = vtanh.pop %v1930
        %v1947 = vtanh.pop %v1931
        %v1948 = vtanh.pop %v1932
        %v1949 = vtanh.pop %v1933
        %v1950 = vtanh.pop %v1934
        %v1951 = vtanh.pop %v1935
        %v1952 = vtanh.pop %v1936
        %v1953 = vtanh.pop %v1937
        %v1954 = vtanh.pop %v1938
        %v1955 = vtanh.pop %v1939
        %v1956 = vtanh.pop %v1940
        %v1957 = vtanh.pop %v1941
        %v1958 = vtanh.pop %v1942
        %v1959 = vtanh.pop %v1943
        %v1960 = vsub.f32 1.0, %v1881
        %v1961 = vsub.f32 1.0, %v1883
        %v1962 = vsub.f32 1.0, %v1885
        %v1963 = vsub.f32 1.0, %v1887
        %v1964 = vsub.f32 1.0, %v1889
        %v1965 = vsub.f32 1.0, %v1891
        %v1966 = vsub.f32 1.0, %v1893
        %v1967 = vsub.f32 1.0, %v1895
        %v1968 = vsub.f32 1.0, %v1897
        %v1969 = vsub.f32 1.0, %v1899
        %v1970 = vsub.f32 1.0, %v1901
        %v1971 = vsub.f32 1.0, %v1903
        %v1972 = vsub.f32 1.0, %v1905
        %v1973 = vsub.f32 1.0, %v1907
        %v1974 = vsub.f32 1.0, %v1909
        %v1975 = vsub.f32 1.0, %v1911
        %v1976 = vmul.f32 %v1960, %v1944
        %v1977 = vmul.f32 %v1961, %v1945
        %v1978 = vmul.f32 %v1962, %v1946
        %v1979 = vmul.f32 %v1963, %v1947
        %v1980 = vmul.f32 %v1964, %v1948
        %v1981 = vmul.f32 %v1965, %v1949
        %v1982 = vmul.f32 %v1966, %v1950
        %v1983 = vmul.f32 %v1967, %v1951
        %v1984 = vmul.f32 %v1968, %v1952
        %v1985 = vmul.f32 %v1969, %v1953
        %v1986 = vmul.f32 %v1970, %v1954
        %v1987 = vmul.f32 %v1971, %v1955
        %v1988 = vmul.f32 %v1972, %v1956
        %v1989 = vmul.f32 %v1973, %v1957
        %v1990 = vmul.f32 %v1974, %v1958
        %v1991 = vmul.f32 %v1975, %v1959
        %v1992 = vmul.f32 %v1881, %v866
        %v1993 = vmul.f32 %v1883, %v867
        %v1994 = vmul.f32 %v1885, %v868
        %v1995 = vmul.f32 %v1887, %v869
        %v1996 = vmul.f32 %v1889, %v870
        %v1997 = vmul.f32 %v1891, %v871
        %v1998 = vmul.f32 %v1893, %v872
        %v1999 = vmul.f32 %v1895, %v873
        %v2000 = vmul.f32 %v1897, %v874
        %v2001 = vmul.f32 %v1899, %v875
        %v2002 = vmul.f32 %v1901, %v876
        %v2003 = vmul.f32 %v1903, %v877
        %v2004 = vmul.f32 %v1905, %v878
        %v2005 = vmul.f32 %v1907, %v879
        %v2006 = vmul.f32 %v1909, %v880
        %v2007 = vmul.f32 %v1911, %v881
        %v2008 = vadd.f32 %v1976, %v1992
        %v2009 = vadd.f32 %v1977, %v1993
        %v2010 = vadd.f32 %v1978, %v1994
        %v2011 = vadd.f32 %v1979, %v1995
        %v2012 = vadd.f32 %v1980, %v1996
        %v2013 = vadd.f32 %v1981, %v1997
        %v2014 = vadd.f32 %v1982, %v1998
        %v2015 = vadd.f32 %v1983, %v1999
        %v2016 = vadd.f32 %v1984, %v2000
        %v2017 = vadd.f32 %v1985, %v2001
        %v2018 = vadd.f32 %v1986, %v2002
        %v2019 = vadd.f32 %v1987, %v2003
        %v2020 = vadd.f32 %v1988, %v2004
        %v2021 = vadd.f32 %v1989, %v2005
        %v2022 = vadd.f32 %v1990, %v2006
        %v2023 = vadd.f32 %v1991, %v2007
        %2024 = vst [vmem:[%s382] sm:$0xff] %v2008
        %2025 = vst [vmem:[%s382 + $0x8] sm:$0xff] %v2009
        %2026 = vst [vmem:[%s382 + $0x10] sm:$0xff] %v2010
        %2027 = vst [vmem:[%s382 + $0x18] sm:$0xff] %v2011
        %2028 = vst [vmem:[%s382 + $0x20] sm:$0xff] %v2012
        %2029 = vst [vmem:[%s382 + $0x28] sm:$0xff] %v2013
        %2030 = vst [vmem:[%s382 + $0x30] sm:$0xff] %v2014
        %2031 = vst [vmem:[%s382 + $0x38] sm:$0xff] %v2015
        %2032 = vst [vmem:[%s382 + $0x40] sm:$0xff] %v2016
        %2033 = vst [vmem:[%s382 + $0x48] sm:$0xff] %v2017
        %2034 = vst [vmem:[%s382 + $0x50] sm:$0xff] %v2018
        %2035 = vst [vmem:[%s382 + $0x58] sm:$0xff] %v2019
        %2036 = vst [vmem:[%s382 + $0x60] sm:$0xff] %v2020
        %2037 = vst [vmem:[%s382 + $0x68] sm:$0xff] %v2021
        %2038 = vst [vmem:[%s382 + $0x70] sm:$0xff] %v2022
        %2039 = vst [vmem:[%s382 + $0x78] sm:$0xff] %v2023
      $region64: #{dmpnn_forward.1} parent=55 // pred_fallthru
        _
      %s2040 = smul.u32 16, %s24
      %p2041 = scmp.lt.s32.totalorder %s2040, 31
      %s2042 = scalar_select %p2041, %s2040, 31
      %s2043 = smul.addr %s2042, 8
      %s2044 = scalar_lea.vmem %s9, %s2043
      // Predicated region
      $region65: #{dmpnn_forward.1} parent=55 // pred_check
        %p2045 = pneg %p254
      $region66: #{dmpnn_forward.1} parent=55 // pred_check_branch
        %2047 = sbr.rel (%p2045) target = $region68
      $region67: #{dmpnn_forward.1} parent=55 // pred_region
        %s2048 = smul.u32 16, %s24
      $region68: #{dmpnn_forward.1} parent=55 // pred_fallthru
        _
    $region56: #{dmpnn_forward.1} parent=5 // pred_fallthru
      _
    %p2049 = scmp.le.s32.totalorder 2, %s15
    // Predicated region
    $region69: #{dmpnn_forward.1} parent=5 // pred_check
      %p2050 = pneg %p2049
    $region70: #{dmpnn_forward.1} parent=5 // pred_check_branch
      %2052 = sbr.rel (%p2050) target = $region72
    $region71: #{dmpnn_forward.1} parent=5 // pred_region
      %s2053 = ssub.s32 %s15, 2
      // Predicated region
      $region73: #{dmpnn_forward.1} parent=71 // pred_check
        %p2054 = pneg %p260
      $region74: #{dmpnn_forward.1} parent=71 // pred_check_branch
        %2056 = sbr.rel (%p2054) target = $region76
      $region75: #{dmpnn_forward.1} parent=71 // pred_region
        %s2057 = smul.u32 16, %s26
        %p2058 = scmp.lt.s32.totalorder %s2057, 31
        %s2059 = scalar_select %p2058, %s2057, 31
        %s2060 = smul.addr %s2059, 8
        %s2061 = scalar_lea.vmem %s9, %s2060
      $region76: #{dmpnn_forward.1} parent=71 // pred_fallthru
        _
    $region72: #{dmpnn_forward.1} parent=5 // pred_fallthru
      _
  $region6: #{dmpnn_forward.1} parent=0 // loop_footer
    %s19 = sadd.s32 1, %s15
  $region7: #{dmpnn_forward.1} parent=0 // loop_footer_branch
    %14 = sbr.rel target = $region3
  $region8: #{dmpnn_forward.1} parent=0 // loop_exit
    _

</llo_original>
